<compile_context>
chip_gen: v7x
topology: tpu7x:2x2x1
jax: 0.10.0
libtpu: 0.0.40
codegen_flags: <defaults>
</compile_context>

<pallas_src>
import functools

import jax
import jax.numpy as jnp
import numpy as np
from jax.experimental import pallas as pl
from jax.experimental.pallas import tpu as pltpu


# ---------------------------------------------------------------------------
# In-kernel helpers
# ---------------------------------------------------------------------------
def _layernorm(x, g, b, eps=1e-5):
    # PyTorch LayerNorm (population variance, eps=1e-5), computed in fp32.
    # Single reduction pass: E[x] and E[x^2] together, var = E[x^2] - E[x]^2.
    xf = x.astype(jnp.float32)
    mean = jnp.mean(xf, axis=-1, keepdims=True)
    mean_sq = jnp.mean(xf * xf, axis=-1, keepdims=True)
    var = mean_sq - mean * mean
    return (xf - mean) * jax.lax.rsqrt(var + eps) * g + b


# ---------------------------------------------------------------------------
# Pallas kernel: all layers for one batch block (layer axis = inner grid axis)
# ---------------------------------------------------------------------------
def transformer_kernel(x_ref, wqkv_ref, wout_ref, wfc_ref, wproj_ref, vec_ref,
                       o_ref, x_state, *, n_head):
    layer = pl.program_id(1)

    # Initialize the resident activation (f32 residual stream) for this batch block.
    @pl.when(layer == 0)
    def _():
        x_state[...] = x_ref[...].astype(jnp.float32)

    xb = x_state[...]                                # (B, L, D) f32
    B, L, D = xb.shape
    H = n_head
    dh = D // H
    bf16 = jnp.bfloat16

    # Packed per-layer vectors: rows = [b_qkv(Q-scaled), b_out, ln1_g, ln1_b,
    #                                   b_fc, b_proj, ln2_g, ln2_b], padded to 4D cols.
    vec = vec_ref[0]                                 # (8, 4D) f32
    b_qkv = vec[0:1, :3 * D]
    b_out = vec[1:2, :D]
    g1 = vec[2:3, :D]
    bt1 = vec[3:4, :D]
    b_fc = vec[4:5, :4 * D]
    b_pr = vec[5:6, :D]
    g2 = vec[6:7, :D]
    bt2 = vec[7:8, :D]

    # Fold the batch block into the matmul M dimension.
    x2 = xb.reshape(B * L, D)                        # leading-dim merge (free)

    # ---- attention branch: x + out_proj(softmax(q k^T) v) ------------------
    # (1/sqrt(dh) was folded into the Q columns of w_qkv/b_qkv at prep time.)
    h = _layernorm(x2, g1, bt1)                                            # (B*L, D)
    qkv = jnp.dot(h.astype(bf16), wqkv_ref[0],
                  preferred_element_type=jnp.float32) + b_qkv              # (B*L, 3D)
    qkv3 = qkv.reshape(B, L, 3 * D)

    # Gather heads onto a leading axis (static lane slices + stack), then fold
    # (head, batch) into one einsum batch dim -> two batched MXU contractions.
    q_g = jnp.stack([qkv3[:, :, i * dh:(i + 1) * dh] for i in range(H)], axis=0)
    k_g = jnp.stack([qkv3[:, :, D + i * dh:D + (i + 1) * dh] for i in range(H)], axis=0)
    v_g = jnp.stack([qkv3[:, :, 2 * D + i * dh:2 * D + (i + 1) * dh] for i in range(H)], axis=0)
    q_g = q_g.reshape(H * B, L, dh)
    k_g = k_g.reshape(H * B, L, dh)
    v_g = v_g.reshape(H * B, L, dh)

    s = jnp.einsum('gld,gmd->glm', q_g.astype(bf16), k_g.astype(bf16),
                   preferred_element_type=jnp.float32)                     # (H*B, L, L)
    s = s - jnp.max(s, axis=-1, keepdims=True)
    p = jnp.exp(s)
    p = p * pl.reciprocal(jnp.sum(p, axis=-1, keepdims=True), approx=True)
    o_g = jnp.einsum('glm,gmd->gld', p.astype(bf16), v_g.astype(bf16),
                     preferred_element_type=jnp.float32)                   # (H*B, L, dh)

    o4 = o_g.reshape(H, B, L, dh)                    # leading-dim split (free)
    attn = jnp.concatenate([o4[i] for i in range(H)], axis=-1)             # (B, L, D)
    attn = attn.reshape(B * L, D)
    attn = jnp.dot(attn.astype(bf16), wout_ref[0],
                   preferred_element_type=jnp.float32) + b_out
    x2 = x2 + attn

    # ---- MLP branch: x + c_proj(QuickGELU(c_fc(LN2(x)))) -------------------
    h2 = _layernorm(x2, g2, bt2)
    f = jnp.dot(h2.astype(bf16), wfc_ref[0],
                preferred_element_type=jnp.float32) + b_fc                 # (B*L, 4D)
    f = f * jax.nn.sigmoid(1.702 * f)                                      # QuickGELU (f32)
    m = jnp.dot(f.astype(bf16), wproj_ref[0],
                preferred_element_type=jnp.float32) + b_pr
    x2 = x2 + m

    x_new = x2.reshape(B, L, D)
    x_state[...] = x_new

    # Output block is resident across the layer axis: only the last layer stores.
    @pl.when(layer == pl.num_programs(1) - 1)
    def _():
        o_ref[...] = x_new.astype(o_ref.dtype)


# ---------------------------------------------------------------------------
# One-time parameter packing: transpose weights, fold scale, cast bf16, stack layers
# ---------------------------------------------------------------------------
def prepare_params(params, n_head, compute_dtype=jnp.bfloat16):
    D = params[0]["ln1_g"].shape[0]
    assert D % n_head == 0
    dh = D // n_head
    scale = 1.0 / float(dh) ** 0.5

    def pad_row(v):
        r = jnp.zeros((4 * D,), jnp.float32)
        return r.at[:v.shape[0]].set(v.astype(jnp.float32))

    w_qkv, w_out, w_fc, w_proj, vecs = [], [], [], [], []
    for p in params:
        wq = p["w_qkv"].T.astype(jnp.float32)              # (D, 3D)
        wq = wq.at[:, :D].multiply(scale)                  # fold 1/sqrt(dh) into Q cols
        bq = p["b_qkv"].astype(jnp.float32).at[:D].multiply(scale)
        w_qkv.append(wq.astype(compute_dtype))
        w_out.append(p["w_out"].T.astype(compute_dtype))   # (D, D)
        w_fc.append(p["w_fc"].T.astype(compute_dtype))     # (D, 4D)
        w_proj.append(p["w_proj"].T.astype(compute_dtype)) # (4D, D)
        vecs.append(jnp.stack([
            pad_row(bq), pad_row(p["b_out"]), pad_row(p["ln1_g"]), pad_row(p["ln1_b"]),
            pad_row(p["b_fc"]), pad_row(p["b_proj"]), pad_row(p["ln2_g"]), pad_row(p["ln2_b"]),
        ], axis=0))                                        # (8, 4D) f32
    return dict(
        w_qkv=jnp.stack(w_qkv, axis=0),    # (Ly, D, 3D) bf16
        w_out=jnp.stack(w_out, axis=0),    # (Ly, D, D)  bf16
        w_fc=jnp.stack(w_fc, axis=0),      # (Ly, D, 4D) bf16
        w_proj=jnp.stack(w_proj, axis=0),  # (Ly, 4D, D) bf16
        vec=jnp.stack(vecs, axis=0),       # (Ly, 8, 4D) f32
    )


# ---------------------------------------------------------------------------
# pallas_call wrapper: grid = (batch blocks [parallel], layers [arbitrary])
# ---------------------------------------------------------------------------
def _default_batch_block(n):
    # Largest divisor of n (<= 8) that still leaves >= 2 blocks on the parallel
    # batch axis (keeps both TensorCores busy on v7x megacore).
    if n <= 1:
        return 1
    best = 1
    for b in range(1, min(n, 8) + 1):
        if n % b == 0 and n // b >= 2:
            best = b
    return best


def _pick_vmem_limit(need_bytes):
    try:
        cap = int(pltpu.get_tpu_info().vmem_capacity_bytes)
    except Exception:
        cap = 128 * 1024 * 1024
    limit = max(int(1.5 * need_bytes), 32 * 1024 * 1024)
    return int(min(limit, int(0.85 * cap)))


def transformer_forward(x, stacked, n_head, batch_block=None, batch_first=False):
    # x: (L, N, D) like PyTorch (default), or (N, L, D) if batch_first=True
    # (passing batch-first avoids two HBM round trips of the activations).
    if not batch_first:
        x = jnp.transpose(x, (1, 0, 2))                # (N, L, D)
    N, L, D = x.shape
    layers = stacked["w_qkv"].shape[0]
    assert D % n_head == 0

    B = _default_batch_block(N) if batch_block is None else batch_block
    assert N % B == 0, "batch must be divisible by the batch block"
    nb = N // B

    operands = [stacked["w_qkv"], stacked["w_out"], stacked["w_fc"],
                stacked["w_proj"], stacked["vec"]]

    def wspec(arr):
        nd = arr.ndim - 1
        return pl.BlockSpec((1,) + arr.shape[1:],
                            lambda n, l, _nd=nd: (l,) + (0,) * _nd)

    in_specs = [pl.BlockSpec((B, L, D), lambda n, l: (n, 0, 0))]
    in_specs += [wspec(a) for a in operands]

    # Advisory cost estimate for the whole call.
    flops = int(N * layers * L * (24 * D * D + 4 * L * D))
    transc = int(N * layers * L * (n_head * L + 4 * D + 2))
    weight_bytes = sum(int(np.prod(a.shape)) * a.dtype.itemsize for a in operands)
    bytes_acc = int(2 * N * L * D * x.dtype.itemsize + weight_bytes * nb)

    # VMEM budget: double-buffered per-layer weights + activation blocks + temporaries.
    per_layer_w = sum(int(np.prod(a.shape[1:])) * a.dtype.itemsize for a in operands)
    act_bytes = B * L * D * 4
    temp_bytes = 3 * B * L * 4 * D * 4 + n_head * B * L * L * 4
    need = 2 * per_layer_w + 5 * act_bytes + 2 * temp_bytes
    vmem_limit = _pick_vmem_limit(need)

    out = pl.pallas_call(
        functools.partial(transformer_kernel, n_head=n_head),
        out_shape=jax.ShapeDtypeStruct((N, L, D), x.dtype),
        grid=(nb, layers),
        in_specs=in_specs,
        out_specs=pl.BlockSpec((B, L, D), lambda n, l: (n, 0, 0)),
        scratch_shapes=[pltpu.VMEM((B, L, D), jnp.float32)],   # resident residual stream
        compiler_params=pltpu.CompilerParams(
            dimension_semantics=("parallel", "arbitrary"),
            vmem_limit_bytes=vmem_limit),
        cost_estimate=pl.CostEstimate(flops=flops, transcendentals=transc,
                                      bytes_accessed=bytes_acc),
    )(x, *operands)

    if not batch_first:
        out = jnp.transpose(out, (1, 0, 2))            # back to (L, N, D)
    return out


# ---------------------------------------------------------------------------
# Deterministic parameter init (shapes from nn.MultiheadAttention / nn.Linear)
# ---------------------------------------------------------------------------
def init_params(key, width, layers):
    D = width
    params = []
    for i in range(layers):
        ks = jax.random.split(jax.random.fold_in(key, i), 8)
        params.append(dict(
            w_qkv=jax.random.normal(ks[0], (3 * D, D), jnp.float32) * 0.02,
            b_qkv=jax.random.normal(ks[1], (3 * D,), jnp.float32) * 0.02,
            w_out=jax.random.normal(ks[2], (D, D), jnp.float32) * 0.02,
            b_out=jax.random.normal(ks[3], (D,), jnp.float32) * 0.02,
            ln1_g=jnp.ones((D,), jnp.float32),
            ln1_b=jnp.zeros((D,), jnp.float32),
            w_fc=jax.random.normal(ks[4], (4 * D, D), jnp.float32) * 0.02,
            b_fc=jax.random.normal(ks[5], (4 * D,), jnp.float32) * 0.02,
            w_proj=jax.random.normal(ks[6], (D, 4 * D), jnp.float32) * 0.02,
            b_proj=jax.random.normal(ks[7], (D,), jnp.float32) * 0.02,
            ln2_g=jnp.ones((D,), jnp.float32),
            ln2_b=jnp.zeros((D,), jnp.float32),
        ))
    return params


# ---------------------------------------------------------------------------
# Pure-JAX f32 reference (mirrors PyTorch semantics) for correctness check
# ---------------------------------------------------------------------------
def ref_resblock(x, p, n_head):       # x: (L, N, D)
    def ln(y, g, b):
        mean = y.mean(-1, keepdims=True)
        var = ((y - mean) ** 2).mean(-1, keepdims=True)
        return (y - mean) / jnp.sqrt(var + 1e-5) * g + b

    L, N, D = x.shape
    dh = D // n_head
    h = ln(x, p["ln1_g"], p["ln1_b"])
    qkv = h @ p["w_qkv"].T + p["b_qkv"]
    q, k, v = jnp.split(qkv, 3, axis=-1)
    q = q.reshape(L, N, n_head, dh) / jnp.sqrt(dh)
    k = k.reshape(L, N, n_head, dh)
    v = v.reshape(L, N, n_head, dh)
    s = jnp.einsum("lnhd,mnhd->nhlm", q, k)
    a = jax.nn.softmax(s, axis=-1)
    o = jnp.einsum("nhlm,mnhd->lnhd", a, v).reshape(L, N, D)
    x = x + (o @ p["w_out"].T + p["b_out"])
    h2 = ln(x, p["ln2_g"], p["ln2_b"])
    f = h2 @ p["w_fc"].T + p["b_fc"]
    f = f * jax.nn.sigmoid(1.702 * f)
    return x + (f @ p["w_proj"].T + p["b_proj"])


if __name__ == "__main__":
    L, N, D, HEADS, LAYERS = 8, 4, 32, 4, 2

    key = jax.random.PRNGKey(0)
    kx, kp = jax.random.split(key)
    x = jax.random.normal(kx, (L, N, D), jnp.float32)
    params = init_params(kp, D, LAYERS)
    stacked = prepare_params(params, HEADS)   # transpose/scale/cast/pack once, off the call path

    out = transformer_forward(x, stacked, HEADS)
    out = jax.block_until_ready(out)

    ref = x
    for p in params:
        ref = ref_resblock(ref, p, HEADS)

    # Tolerance accounts for bf16 MXU operands vs. the pure-f32 reference.
    np.testing.assert_allclose(np.asarray(out), np.asarray(ref), atol=1e-2, rtol=2e-2)
    print("KERNEL_OK")
</pallas_src>

<mosaic_0001>
module attributes {stable_mosaic.version = 11 : i64} {
  func.func @transformer_kernel(%arg0: i32, %arg1: i32, %arg2: memref<2x8x32xf32, #tpu.memory_space<vmem>>, %arg3: memref<1x32x96xbf16, #tpu.memory_space<vmem>>, %arg4: memref<1x32x32xbf16, #tpu.memory_space<vmem>>, %arg5: memref<1x32x128xbf16, #tpu.memory_space<vmem>>, %arg6: memref<1x128x32xbf16, #tpu.memory_space<vmem>>, %arg7: memref<1x8x128xf32, #tpu.memory_space<vmem>>, %arg8: memref<2x8x32xf32, #tpu.memory_space<vmem>>, %arg9: memref<2x8x32xf32, #tpu.memory_space<vmem>>) attributes {dimension_semantics = [#tpu.dimension_semantics<parallel>, #tpu.dimension_semantics<arbitrary>], iteration_bounds = array<i64: 2, 2>, scalar_prefetch = 0 : i64, scratch_operands = 1 : i64, tpu.core_type = #tpu.core_type<tc>, window_params = [{transform_indices = @transform_0, window_bounds = array<i64: 2, 8, 32>}, {transform_indices = @transform_1, window_bounds = array<i64: 1, 32, 96>}, {transform_indices = @transform_2, window_bounds = array<i64: 1, 32, 32>}, {transform_indices = @transform_3, window_bounds = array<i64: 1, 32, 128>}, {transform_indices = @transform_4, window_bounds = array<i64: 1, 128, 32>}, {transform_indices = @transform_5, window_bounds = array<i64: 1, 8, 128>}, {transform_indices = @transform_6, window_bounds = array<i64: 2, 8, 32>}]} {
    %c0_i32 = arith.constant 0 : i32
    %0 = arith.cmpi eq, %arg1, %c0_i32 : i32
    %1 = arith.extui %0 : i1 to i32
    %c0_i32_0 = arith.constant 0 : i32
    %2 = arith.cmpi ne, %1, %c0_i32_0 : i32
    scf.if %2 {
      %c0_41 = arith.constant 0 : index
      %c0_42 = arith.constant 0 : index
      %c0_43 = arith.constant 0 : index
      %156 = vector.load %arg2[%c0_41, %c0_42, %c0_43] : memref<2x8x32xf32, #tpu.memory_space<vmem>>, vector<2x8x32xf32>
      %c0_44 = arith.constant 0 : index
      %c0_45 = arith.constant 0 : index
      %c0_46 = arith.constant 0 : index
      %157 = vector.load %arg9[%c0_44, %c0_45, %c0_46] : memref<2x8x32xf32, #tpu.memory_space<vmem>>, vector<2x8x32xf32>
      tpu.vector_store %arg9[%c0_44, %c0_45, %c0_46], %156 {strides = array<i32>} : memref<2x8x32xf32, #tpu.memory_space<vmem>>, vector<2x8x32xf32>,
    } else {
    }
    %c0 = arith.constant 0 : index
    %c0_1 = arith.constant 0 : index
    %c0_2 = arith.constant 0 : index
    %3 = vector.load %arg9[%c0, %c0_1, %c0_2] : memref<2x8x32xf32, #tpu.memory_space<vmem>>, vector<2x8x32xf32>
    %c0_3 = arith.constant 0 : index
    %c0_4 = arith.constant 0 : index
    %c0_5 = arith.constant 0 : index
    %4 = vector.load %arg7[%c0_3, %c0_4, %c0_5] : memref<1x8x128xf32, #tpu.memory_space<vmem>>, vector<1x8x128xf32>
    %5 = vector.shape_cast %4 : vector<1x8x128xf32> to vector<8x128xf32>
    %6 = vector.extract_strided_slice %5 {offsets = [0, 0], sizes = [1, 96], strides = [1, 1]} : vector<8x128xf32> to vector<1x96xf32>
    %7 = vector.extract_strided_slice %5 {offsets = [1, 0], sizes = [1, 32], strides = [1, 1]} : vector<8x128xf32> to vector<1x32xf32>
    %8 = vector.extract_strided_slice %5 {offsets = [2, 0], sizes = [1, 32], strides = [1, 1]} : vector<8x128xf32> to vector<1x32xf32>
    %9 = vector.extract_strided_slice %5 {offsets = [3, 0], sizes = [1, 32], strides = [1, 1]} : vector<8x128xf32> to vector<1x32xf32>
    %10 = vector.extract_strided_slice %5 {offsets = [4, 0], sizes = [1, 128], strides = [1, 1]} : vector<8x128xf32> to vector<1x128xf32>
    %11 = vector.extract_strided_slice %5 {offsets = [5, 0], sizes = [1, 32], strides = [1, 1]} : vector<8x128xf32> to vector<1x32xf32>
    %12 = vector.extract_strided_slice %5 {offsets = [6, 0], sizes = [1, 32], strides = [1, 1]} : vector<8x128xf32> to vector<1x32xf32>
    %13 = vector.extract_strided_slice %5 {offsets = [7, 0], sizes = [1, 32], strides = [1, 1]} : vector<8x128xf32> to vector<1x32xf32>
    %14 = vector.shape_cast %3 : vector<2x8x32xf32> to vector<16x32xf32>
    %cst = arith.constant dense<0.000000e+00> : vector<16xf32>
    %15 = vector.multi_reduction <add>, %14, %cst [1] : vector<16x32xf32> to vector<16xf32>
    %16 = vector.shape_cast %15 : vector<16xf32> to vector<16x1xf32>
    %cst_6 = arith.constant 3.200000e+01 : f32
    %17 = vector.broadcast %cst_6 : f32 to vector<16x1xf32>
    %18 = arith.divf %16, %17 : vector<16x1xf32>
    %19 = arith.mulf %14, %14 : vector<16x32xf32>
    %cst_7 = arith.constant dense<0.000000e+00> : vector<16xf32>
    %20 = vector.multi_reduction <add>, %19, %cst_7 [1] : vector<16x32xf32> to vector<16xf32>
    %21 = vector.shape_cast %20 : vector<16xf32> to vector<16x1xf32>
    %cst_8 = arith.constant 3.200000e+01 : f32
    %22 = vector.broadcast %cst_8 : f32 to vector<16x1xf32>
    %23 = arith.divf %21, %22 : vector<16x1xf32>
    %24 = arith.mulf %18, %18 : vector<16x1xf32>
    %25 = arith.subf %23, %24 : vector<16x1xf32>
    %26 = vector.broadcast %18 : vector<16x1xf32> to vector<16x32xf32>
    %27 = arith.subf %14, %26 : vector<16x32xf32>
    %cst_9 = arith.constant 9.99999974E-6 : f32
    %28 = vector.broadcast %cst_9 : f32 to vector<16x1xf32>
    %29 = arith.addf %25, %28 : vector<16x1xf32>
    %30 = math.rsqrt %29 : vector<16x1xf32>
    %31 = vector.broadcast %30 : vector<16x1xf32> to vector<16x32xf32>
    %32 = arith.mulf %27, %31 : vector<16x32xf32>
    %33 = vector.broadcast %8 : vector<1x32xf32> to vector<16x32xf32>
    %34 = arith.mulf %32, %33 : vector<16x32xf32>
    %35 = vector.broadcast %9 : vector<1x32xf32> to vector<16x32xf32>
    %36 = arith.addf %34, %35 : vector<16x32xf32>
    %37 = arith.truncf %36 : vector<16x32xf32> to vector<16x32xbf16>
    %c0_10 = arith.constant 0 : index
    %c0_11 = arith.constant 0 : index
    %c0_12 = arith.constant 0 : index
    %38 = vector.load %arg3[%c0_10, %c0_11, %c0_12] : memref<1x32x96xbf16, #tpu.memory_space<vmem>>, vector<1x32x96xbf16>
    %39 = vector.shape_cast %38 : vector<1x32x96xbf16> to vector<32x96xbf16>
    %cst_13 = arith.constant dense<0.000000e+00> : vector<16x96xf32>
    %40 = tpu.matmul %37, %39, %cst_13 {dimension_numbers = #tpu.dot_dimension_numbers<[1], [0], [0], [1], [0, 0, 1, 1], [], []>} : vector<16x32xbf16>, vector<32x96xbf16>, vector<16x96xf32> -> vector<16x96xf32>
    %41 = vector.broadcast %6 : vector<1x96xf32> to vector<16x96xf32>
    %42 = arith.addf %40, %41 : vector<16x96xf32>
    %43 = vector.shape_cast %42 : vector<16x96xf32> to vector<2x8x96xf32>
    %44 = vector.extract_strided_slice %43 {offsets = [0, 0, 0], sizes = [2, 8, 8], strides = [1, 1, 1]} : vector<2x8x96xf32> to vector<2x8x8xf32>
    %45 = vector.extract_strided_slice %43 {offsets = [0, 0, 8], sizes = [2, 8, 8], strides = [1, 1, 1]} : vector<2x8x96xf32> to vector<2x8x8xf32>
    %46 = vector.extract_strided_slice %43 {offsets = [0, 0, 16], sizes = [2, 8, 8], strides = [1, 1, 1]} : vector<2x8x96xf32> to vector<2x8x8xf32>
    %47 = vector.extract_strided_slice %43 {offsets = [0, 0, 24], sizes = [2, 8, 8], strides = [1, 1, 1]} : vector<2x8x96xf32> to vector<2x8x8xf32>
    %48 = vector.shape_cast %44 : vector<2x8x8xf32> to vector<1x2x8x8xf32>
    %49 = vector.shape_cast %45 : vector<2x8x8xf32> to vector<1x2x8x8xf32>
    %50 = vector.shape_cast %46 : vector<2x8x8xf32> to vector<1x2x8x8xf32>
    %51 = vector.shape_cast %47 : vector<2x8x8xf32> to vector<1x2x8x8xf32>
    %52 = tpu.concatenate %48, %49, %50, %51 in 0 : vector<1x2x8x8xf32>, vector<1x2x8x8xf32>, vector<1x2x8x8xf32>, vector<1x2x8x8xf32> -> vector<4x2x8x8xf32>
    %53 = vector.extract_strided_slice %43 {offsets = [0, 0, 32], sizes = [2, 8, 8], strides = [1, 1, 1]} : vector<2x8x96xf32> to vector<2x8x8xf32>
    %54 = vector.extract_strided_slice %43 {offsets = [0, 0, 40], sizes = [2, 8, 8], strides = [1, 1, 1]} : vector<2x8x96xf32> to vector<2x8x8xf32>
    %55 = vector.extract_strided_slice %43 {offsets = [0, 0, 48], sizes = [2, 8, 8], strides = [1, 1, 1]} : vector<2x8x96xf32> to vector<2x8x8xf32>
    %56 = vector.extract_strided_slice %43 {offsets = [0, 0, 56], sizes = [2, 8, 8], strides = [1, 1, 1]} : vector<2x8x96xf32> to vector<2x8x8xf32>
    %57 = vector.shape_cast %53 : vector<2x8x8xf32> to vector<1x2x8x8xf32>
    %58 = vector.shape_cast %54 : vector<2x8x8xf32> to vector<1x2x8x8xf32>
    %59 = vector.shape_cast %55 : vector<2x8x8xf32> to vector<1x2x8x8xf32>
    %60 = vector.shape_cast %56 : vector<2x8x8xf32> to vector<1x2x8x8xf32>
    %61 = tpu.concatenate %57, %58, %59, %60 in 0 : vector<1x2x8x8xf32>, vector<1x2x8x8xf32>, vector<1x2x8x8xf32>, vector<1x2x8x8xf32> -> vector<4x2x8x8xf32>
    %62 = vector.extract_strided_slice %43 {offsets = [0, 0, 64], sizes = [2, 8, 8], strides = [1, 1, 1]} : vector<2x8x96xf32> to vector<2x8x8xf32>
    %63 = vector.extract_strided_slice %43 {offsets = [0, 0, 72], sizes = [2, 8, 8], strides = [1, 1, 1]} : vector<2x8x96xf32> to vector<2x8x8xf32>
    %64 = vector.extract_strided_slice %43 {offsets = [0, 0, 80], sizes = [2, 8, 8], strides = [1, 1, 1]} : vector<2x8x96xf32> to vector<2x8x8xf32>
    %65 = vector.extract_strided_slice %43 {offsets = [0, 0, 88], sizes = [2, 8, 8], strides = [1, 1, 1]} : vector<2x8x96xf32> to vector<2x8x8xf32>
    %66 = vector.shape_cast %62 : vector<2x8x8xf32> to vector<1x2x8x8xf32>
    %67 = vector.shape_cast %63 : vector<2x8x8xf32> to vector<1x2x8x8xf32>
    %68 = vector.shape_cast %64 : vector<2x8x8xf32> to vector<1x2x8x8xf32>
    %69 = vector.shape_cast %65 : vector<2x8x8xf32> to vector<1x2x8x8xf32>
    %70 = tpu.concatenate %66, %67, %68, %69 in 0 : vector<1x2x8x8xf32>, vector<1x2x8x8xf32>, vector<1x2x8x8xf32>, vector<1x2x8x8xf32> -> vector<4x2x8x8xf32>
    %71 = vector.shape_cast %52 : vector<4x2x8x8xf32> to vector<8x8x8xf32>
    %72 = vector.shape_cast %61 : vector<4x2x8x8xf32> to vector<8x8x8xf32>
    %73 = vector.shape_cast %70 : vector<4x2x8x8xf32> to vector<8x8x8xf32>
    %74 = arith.truncf %71 : vector<8x8x8xf32> to vector<8x8x8xbf16>
    %75 = arith.truncf %72 : vector<8x8x8xf32> to vector<8x8x8xbf16>
    "tpu.trace_start"() <{level = 10 : i32, message = "gld,gmd->glm"}> : () -> ()
    %cst_14 = arith.constant dense<0.000000e+00> : vector<8x8x8xf32>
    %76 = tpu.matmul %74, %75, %cst_14 {dimension_numbers = #tpu.dot_dimension_numbers<[2], [2], [1], [1], [0, 0, 0, 1, 1, 1], [0], [0]>} : vector<8x8x8xbf16>, vector<8x8x8xbf16>, vector<8x8x8xf32> -> vector<8x8x8xf32>
    "tpu.trace_stop"() : () -> ()
    %cst_15 = arith.constant dense<0xFF800000> : vector<8x8xf32>
    %77 = vector.multi_reduction <maximumf>, %76, %cst_15 [2] : vector<8x8x8xf32> to vector<8x8xf32>
    %78 = vector.shape_cast %77 : vector<8x8xf32> to vector<8x8x1xf32>
    %79 = vector.broadcast %78 : vector<8x8x1xf32> to vector<8x8x8xf32>
    %80 = arith.subf %76, %79 : vector<8x8x8xf32>
    %81 = math.exp %80 : vector<8x8x8xf32>
    %cst_16 = arith.constant dense<0.000000e+00> : vector<8x8xf32>
    %82 = vector.multi_reduction <add>, %81, %cst_16 [2] : vector<8x8x8xf32> to vector<8x8xf32>
    %83 = vector.shape_cast %82 : vector<8x8xf32> to vector<8x8x1xf32>
    %84 = tpu.reciprocal %83 {approx = true} : vector<8x8x1xf32> -> vector<8x8x1xf32>
    %85 = vector.broadcast %84 : vector<8x8x1xf32> to vector<8x8x8xf32>
    %86 = arith.mulf %81, %85 : vector<8x8x8xf32>
    %87 = arith.truncf %86 : vector<8x8x8xf32> to vector<8x8x8xbf16>
    %88 = arith.truncf %73 : vector<8x8x8xf32> to vector<8x8x8xbf16>
    "tpu.trace_start"() <{level = 10 : i32, message = "glm,gmd->gld"}> : () -> ()
    %cst_17 = arith.constant dense<0.000000e+00> : vector<8x8x8xf32>
    %89 = tpu.matmul %87, %88, %cst_17 {dimension_numbers = #tpu.dot_dimension_numbers<[2], [1], [1], [2], [0, 0, 0, 1, 1, 2], [0], [0]>} : vector<8x8x8xbf16>, vector<8x8x8xbf16>, vector<8x8x8xf32> -> vector<8x8x8xf32>
    "tpu.trace_stop"() : () -> ()
    %90 = vector.shape_cast %89 : vector<8x8x8xf32> to vector<4x2x8x8xf32>
    %91 = vector.extract_strided_slice %90 {offsets = [0, 0, 0, 0], sizes = [1, 2, 8, 8], strides = [1, 1, 1, 1]} : vector<4x2x8x8xf32> to vector<1x2x8x8xf32>
    %92 = vector.shape_cast %91 : vector<1x2x8x8xf32> to vector<2x8x8xf32>
    %93 = vector.extract_strided_slice %90 {offsets = [1, 0, 0, 0], sizes = [1, 2, 8, 8], strides = [1, 1, 1, 1]} : vector<4x2x8x8xf32> to vector<1x2x8x8xf32>
    %94 = vector.shape_cast %93 : vector<1x2x8x8xf32> to vector<2x8x8xf32>
    %95 = vector.extract_strided_slice %90 {offsets = [2, 0, 0, 0], sizes = [1, 2, 8, 8], strides = [1, 1, 1, 1]} : vector<4x2x8x8xf32> to vector<1x2x8x8xf32>
    %96 = vector.shape_cast %95 : vector<1x2x8x8xf32> to vector<2x8x8xf32>
    %97 = vector.extract_strided_slice %90 {offsets = [3, 0, 0, 0], sizes = [1, 2, 8, 8], strides = [1, 1, 1, 1]} : vector<4x2x8x8xf32> to vector<1x2x8x8xf32>
    %98 = vector.shape_cast %97 : vector<1x2x8x8xf32> to vector<2x8x8xf32>
    %99 = tpu.concatenate %92, %94, %96, %98 in 2 : vector<2x8x8xf32>, vector<2x8x8xf32>, vector<2x8x8xf32>, vector<2x8x8xf32> -> vector<2x8x32xf32>
    %100 = vector.shape_cast %99 : vector<2x8x32xf32> to vector<16x32xf32>
    %101 = arith.truncf %100 : vector<16x32xf32> to vector<16x32xbf16>
    %c0_18 = arith.constant 0 : index
    %c0_19 = arith.constant 0 : index
    %c0_20 = arith.constant 0 : index
    %102 = vector.load %arg4[%c0_18, %c0_19, %c0_20] : memref<1x32x32xbf16, #tpu.memory_space<vmem>>, vector<1x32x32xbf16>
    %103 = vector.shape_cast %102 : vector<1x32x32xbf16> to vector<32x32xbf16>
    %cst_21 = arith.constant dense<0.000000e+00> : vector<16x32xf32>
    %104 = tpu.matmul %101, %103, %cst_21 {dimension_numbers = #tpu.dot_dimension_numbers<[1], [0], [0], [1], [0, 0, 1, 1], [], []>} : vector<16x32xbf16>, vector<32x32xbf16>, vector<16x32xf32> -> vector<16x32xf32>
    %105 = vector.broadcast %7 : vector<1x32xf32> to vector<16x32xf32>
    %106 = arith.addf %104, %105 : vector<16x32xf32>
    %107 = arith.addf %14, %106 : vector<16x32xf32>
    %cst_22 = arith.constant dense<0.000000e+00> : vector<16xf32>
    %108 = vector.multi_reduction <add>, %107, %cst_22 [1] : vector<16x32xf32> to vector<16xf32>
    %109 = vector.shape_cast %108 : vector<16xf32> to vector<16x1xf32>
    %cst_23 = arith.constant 3.200000e+01 : f32
    %110 = vector.broadcast %cst_23 : f32 to vector<16x1xf32>
    %111 = arith.divf %109, %110 : vector<16x1xf32>
    %112 = arith.mulf %107, %107 : vector<16x32xf32>
    %cst_24 = arith.constant dense<0.000000e+00> : vector<16xf32>
    %113 = vector.multi_reduction <add>, %112, %cst_24 [1] : vector<16x32xf32> to vector<16xf32>
    %114 = vector.shape_cast %113 : vector<16xf32> to vector<16x1xf32>
    %cst_25 = arith.constant 3.200000e+01 : f32
    %115 = vector.broadcast %cst_25 : f32 to vector<16x1xf32>
    %116 = arith.divf %114, %115 : vector<16x1xf32>
    %117 = arith.mulf %111, %111 : vector<16x1xf32>
    %118 = arith.subf %116, %117 : vector<16x1xf32>
    %119 = vector.broadcast %111 : vector<16x1xf32> to vector<16x32xf32>
    %120 = arith.subf %107, %119 : vector<16x32xf32>
    %cst_26 = arith.constant 9.99999974E-6 : f32
    %121 = vector.broadcast %cst_26 : f32 to vector<16x1xf32>
    %122 = arith.addf %118, %121 : vector<16x1xf32>
    %123 = math.rsqrt %122 : vector<16x1xf32>
    %124 = vector.broadcast %123 : vector<16x1xf32> to vector<16x32xf32>
    %125 = arith.mulf %120, %124 : vector<16x32xf32>
    %126 = vector.broadcast %12 : vector<1x32xf32> to vector<16x32xf32>
    %127 = arith.mulf %125, %126 : vector<16x32xf32>
    %128 = vector.broadcast %13 : vector<1x32xf32> to vector<16x32xf32>
    %129 = arith.addf %127, %128 : vector<16x32xf32>
    %130 = arith.truncf %129 : vector<16x32xf32> to vector<16x32xbf16>
    %c0_27 = arith.constant 0 : index
    %c0_28 = arith.constant 0 : index
    %c0_29 = arith.constant 0 : index
    %131 = vector.load %arg5[%c0_27, %c0_28, %c0_29] : memref<1x32x128xbf16, #tpu.memory_space<vmem>>, vector<1x32x128xbf16>
    %132 = vector.shape_cast %131 : vector<1x32x128xbf16> to vector<32x128xbf16>
    %cst_30 = arith.constant dense<0.000000e+00> : vector<16x128xf32>
    %133 = tpu.matmul %130, %132, %cst_30 {dimension_numbers = #tpu.dot_dimension_numbers<[1], [0], [0], [1], [0, 0, 1, 1], [], []>} : vector<16x32xbf16>, vector<32x128xbf16>, vector<16x128xf32> -> vector<16x128xf32>
    %134 = vector.broadcast %10 : vector<1x128xf32> to vector<16x128xf32>
    %135 = arith.addf %133, %134 : vector<16x128xf32>
    %cst_31 = arith.constant 1.702000e+00 : f32
    %136 = vector.broadcast %cst_31 : f32 to vector<16x128xf32>
    %137 = arith.mulf %136, %135 : vector<16x128xf32>
    %138 = arith.negf %137 : vector<16x128xf32>
    %139 = math.exp %138 : vector<16x128xf32>
    %cst_32 = arith.constant 1.000000e+00 : f32
    %140 = vector.broadcast %cst_32 : f32 to vector<16x128xf32>
    %141 = arith.addf %140, %139 : vector<16x128xf32>
    %142 = arith.divf %140, %141 : vector<16x128xf32>
    %143 = arith.mulf %135, %142 : vector<16x128xf32>
    %144 = arith.truncf %143 : vector<16x128xf32> to vector<16x128xbf16>
    %c0_33 = arith.constant 0 : index
    %c0_34 = arith.constant 0 : index
    %c0_35 = arith.constant 0 : index
    %145 = vector.load %arg6[%c0_33, %c0_34, %c0_35] : memref<1x128x32xbf16, #tpu.memory_space<vmem>>, vector<1x128x32xbf16>
    %146 = vector.shape_cast %145 : vector<1x128x32xbf16> to vector<128x32xbf16>
    %cst_36 = arith.constant dense<0.000000e+00> : vector<16x32xf32>
    %147 = tpu.matmul %144, %146, %cst_36 {dimension_numbers = #tpu.dot_dimension_numbers<[1], [0], [0], [1], [0, 0, 1, 1], [], []>} : vector<16x128xbf16>, vector<128x32xbf16>, vector<16x32xf32> -> vector<16x32xf32>
    %148 = vector.broadcast %11 : vector<1x32xf32> to vector<16x32xf32>
    %149 = arith.addf %147, %148 : vector<16x32xf32>
    %150 = arith.addf %107, %149 : vector<16x32xf32>
    %151 = vector.shape_cast %150 : vector<16x32xf32> to vector<2x8x32xf32>
    %c0_37 = arith.constant 0 : index
    %c0_38 = arith.constant 0 : index
    %c0_39 = arith.constant 0 : index
    %152 = vector.load %arg9[%c0_37, %c0_38, %c0_39] : memref<2x8x32xf32, #tpu.memory_space<vmem>>, vector<2x8x32xf32>
    tpu.vector_store %arg9[%c0_37, %c0_38, %c0_39], %151 {strides = array<i32>} : memref<2x8x32xf32, #tpu.memory_space<vmem>>, vector<2x8x32xf32>,
    %c1_i32 = arith.constant 1 : i32
    %153 = arith.cmpi eq, %arg1, %c1_i32 : i32
    %154 = arith.extui %153 : i1 to i32
    %c0_i32_40 = arith.constant 0 : i32
    %155 = arith.cmpi ne, %154, %c0_i32_40 : i32
    scf.if %155 {
      %c0_41 = arith.constant 0 : index
      %c0_42 = arith.constant 0 : index
      %c0_43 = arith.constant 0 : index
      %156 = vector.load %arg8[%c0_41, %c0_42, %c0_43] : memref<2x8x32xf32, #tpu.memory_space<vmem>>, vector<2x8x32xf32>
      tpu.vector_store %arg8[%c0_41, %c0_42, %c0_43], %151 {strides = array<i32>} : memref<2x8x32xf32, #tpu.memory_space<vmem>>, vector<2x8x32xf32>,
    } else {
    }
    return
  }
  func.func @transform_0(%arg0: i32, %arg1: i32) -> (i32, i32, i32) {
    %c0_i32 = arith.constant 0 : i32
    %c0_i32_0 = arith.constant 0 : i32
    %c0_i32_1 = arith.constant 0 : i32
    return %arg0, %c0_i32, %c0_i32_0 : i32, i32, i32
  }
  func.func @transform_1(%arg0: i32, %arg1: i32) -> (i32, i32, i32) {
    %c0_i32 = arith.constant 0 : i32
    %c0_i32_0 = arith.constant 0 : i32
    %c0_i32_1 = arith.constant 0 : i32
    return %arg1, %c0_i32, %c0_i32_0 : i32, i32, i32
  }
  func.func @transform_2(%arg0: i32, %arg1: i32) -> (i32, i32, i32) {
    %c0_i32 = arith.constant 0 : i32
    %c0_i32_0 = arith.constant 0 : i32
    %c0_i32_1 = arith.constant 0 : i32
    return %arg1, %c0_i32, %c0_i32_0 : i32, i32, i32
  }
  func.func @transform_3(%arg0: i32, %arg1: i32) -> (i32, i32, i32) {
    %c0_i32 = arith.constant 0 : i32
    %c0_i32_0 = arith.constant 0 : i32
    %c0_i32_1 = arith.constant 0 : i32
    return %arg1, %c0_i32, %c0_i32_0 : i32, i32, i32
  }
  func.func @transform_4(%arg0: i32, %arg1: i32) -> (i32, i32, i32) {
    %c0_i32 = arith.constant 0 : i32
    %c0_i32_0 = arith.constant 0 : i32
    %c0_i32_1 = arith.constant 0 : i32
    return %arg1, %c0_i32, %c0_i32_0 : i32, i32, i32
  }
  func.func @transform_5(%arg0: i32, %arg1: i32) -> (i32, i32, i32) {
    %c0_i32 = arith.constant 0 : i32
    %c0_i32_0 = arith.constant 0 : i32
    %c0_i32_1 = arith.constant 0 : i32
    return %arg1, %c0_i32, %c0_i32_0 : i32, i32, i32
  }
  func.func @transform_6(%arg0: i32, %arg1: i32) -> (i32, i32, i32) {
    %c0_i32 = arith.constant 0 : i32
    %c0_i32_0 = arith.constant 0 : i32
    %c0_i32_1 = arith.constant 0 : i32
    return %arg0, %c0_i32, %c0_i32_0 : i32, i32, i32
  }
}

</mosaic_0001>

<llo_original>
// kernel: tpu_custom_call.1
$region0: #{tpu_custom_call.1}
  #allocation0 [shape = 'u32[]', space=smem, size = 0x4, offset = 0x4, fixed_abs, tag = 'smem constant byte address 0x4 - core index']
  #allocation1 [shape = 'u32[144,128]{1,0:T(1,128)}', space=vmem, size = 0x12000, scoped, tag = 'internal scratch']
  #allocation2 [shape = 'f32[2,8,32]{2,1,0:T(8,128)}', space=vmem, size = 0x2000, scoped, tag = 'scratch operand']
  %s0 = inlined_call_operand.vmem [shape: f32[4,8,32], index: 0, kind: input, shape index: {}]
  %s1 = inlined_call_operand.vmem [shape: bf16[2,32,96], index: 1, kind: input, shape index: {}]
  %s2 = inlined_call_operand.vmem [shape: bf16[2,32,32], index: 2, kind: input, shape index: {}]
  %s3 = inlined_call_operand.vmem [shape: bf16[2,32,128], index: 3, kind: input, shape index: {}]
  %s4 = inlined_call_operand.vmem [shape: bf16[2,128,32], index: 4, kind: input, shape index: {}]
  %s5 = inlined_call_operand.vmem [shape: f32[2,8,128], index: 5, kind: input, shape index: {}]
  %s6 = inlined_call_operand.hbm [shape: f32[4,8,32], index: 6, kind: output, shape index: {}]
  %s7 = sld [smem:[#allocation0]]
  $region65: #{tpu_custom_call.1} parent=0
    _
  %s9 = ssub.s32 1, %s7
  %s10 = scalar_select 0, %s9, %s7
  $region1: #{tpu_custom_call.1} parent=0
    #allocation3 [shape = 'u8[16384]{0}', space=vmem, size = 0x4000, scoped, tag = 'output window, operand 0']
    #allocation4 [shape = 's32[2]{0}', space=sflag, size = 0x8, scoped, tag = 'scoped memory for tpu_custom_call.1']
    %11 = vsyncpa [#allocation4], 0
    %s12 = scalar_lea.sflag [#allocation4], 1
    %13 = vsyncpa %s12, 0
    loop: start=0, step=1, limit=6
    $region2: #{tpu_custom_call.1} parent=1 // loop_pre_header
      _
    $region3: #{tpu_custom_call.1} parent=1 // loop_header
      %s15 = sphi 0, %s19
      %p16 = scmp.ge.s32.totalorder %s15, 6
      %s22 = sphi 0, %s34
      %s23 = sphi 0, %s30
      %s24 = sphi 0, %s22
      %s25 = sphi 0, %s23
      %s26 = sphi 0, %s24
      %s27 = sphi 0, %s25
      %s37 = sphi 0, %s39
      %s40 = sphi 0, %s37
      %s41 = sphi 0, %s40
      %s57 = sphi 0, %s41
      %s63 = sphi 0, %s65
      %s66 = sphi 0, %s63
      %s67 = sphi 0, %s66
      %s83 = sphi 0, %s67
      %s89 = sphi 0, %s91
      %s92 = sphi 0, %s89
      %s93 = sphi 0, %s92
      %s109 = sphi 0, %s93
      %s115 = sphi 0, %s117
      %s118 = sphi 0, %s115
      %s119 = sphi 0, %s118
      %s135 = sphi 0, %s119
      %s141 = sphi 0, %s143
      %s144 = sphi 0, %s141
      %s145 = sphi 0, %s144
      %s161 = sphi 0, %s145
      %s167 = sphi 0, %s169
      %s170 = sphi 0, %s167
      %s171 = sphi 0, %s170
      %s187 = sphi 0, %s171
      %s193 = sphi 0, %s195
      %s196 = sphi 0, %s193
      %s197 = sphi 0, %s196
      %s213 = sphi 0, %s197
    $region4: #{tpu_custom_call.1} parent=1 // loop_header_branch
      %18 = sbr.rel (%p16) target = $region8
    $region5: #{tpu_custom_call.1} parent=1 // loop_body
      %s20 = ssub.s32 %s15, 1
      %s21 = ssub.s32 %s15, 2
      %s28 = sadd.s32 1, %s23
      %p29 = scmp.ge.s32.totalorder %s28, 2
      %s30 = scalar_select %p29, 0, %s28
      %s31 = sadd.s32 1, %s22
      %s32 = scalar_select %p29, %s31, %s22
      %p33 = scmp.ge.s32.totalorder %s32, 2
      %s34 = scalar_select %p33, 0, %s32
      %s35 = ssub.s32 %s22, %s34
      %p36 = scmp.eq.s32.totalorder %s35, 0
      %s38 = sadd.s32 %s37, 1
      %s39 = scalar_select %p36, %s37, %s38
      %p42 = pneg %p36
      %p43 = scmp.eq.s32.totalorder %s15, 3
      %p44 = por %p42, %p43
      %p45 = scmp.ne.s32.totalorder %s37, %s40
      %p46 = scmp.eq.s32.totalorder %s15, 0
      %p47 = por %p45, %p46
      %p48 = scmp.ne.s32.totalorder %s37, %s40
      %p49 = scmp.eq.s32.totalorder %s20, 3
      %p50 = por %p48, %p49
      %p51 = scmp.ne.s32.totalorder %s40, %s41
      %p52 = scmp.eq.s32.totalorder %s20, 0
      %p53 = por %p51, %p52
      %p54 = scmp.ne.s32.totalorder %s40, %s41
      %p55 = scmp.eq.s32.totalorder %s21, 3
      %p56 = por %p54, %p55
      %p58 = scmp.ne.s32.totalorder %s41, %s57
      %p59 = scmp.eq.s32.totalorder %s21, 0
      %p60 = por %p58, %p59
      %s61 = ssub.s32 %s23, %s30
      %p62 = scmp.eq.s32.totalorder %s61, 0
      %s64 = sadd.s32 %s63, 1
      %s65 = scalar_select %p62, %s63, %s64
      %p68 = pneg %p62
      %p69 = scmp.eq.s32.totalorder %s15, 3
      %p70 = por %p68, %p69
      %p71 = scmp.ne.s32.totalorder %s63, %s66
      %p72 = scmp.eq.s32.totalorder %s15, 0
      %p73 = por %p71, %p72
      %p74 = scmp.ne.s32.totalorder %s63, %s66
      %p75 = scmp.eq.s32.totalorder %s20, 3
      %p76 = por %p74, %p75
      %p77 = scmp.ne.s32.totalorder %s66, %s67
      %p78 = scmp.eq.s32.totalorder %s20, 0
      %p79 = por %p77, %p78
      %p80 = scmp.ne.s32.totalorder %s66, %s67
      %p81 = scmp.eq.s32.totalorder %s21, 3
      %p82 = por %p80, %p81
      %p84 = scmp.ne.s32.totalorder %s67, %s83
      %p85 = scmp.eq.s32.totalorder %s21, 0
      %p86 = por %p84, %p85
      %s87 = ssub.s32 %s23, %s30
      %p88 = scmp.eq.s32.totalorder %s87, 0
      %s90 = sadd.s32 %s89, 1
      %s91 = scalar_select %p88, %s89, %s90
      %p94 = pneg %p88
      %p95 = scmp.eq.s32.totalorder %s15, 3
      %p96 = por %p94, %p95
      %p97 = scmp.ne.s32.totalorder %s89, %s92
      %p98 = scmp.eq.s32.totalorder %s15, 0
      %p99 = por %p97, %p98
      %p100 = scmp.ne.s32.totalorder %s89, %s92
      %p101 = scmp.eq.s32.totalorder %s20, 3
      %p102 = por %p100, %p101
      %p103 = scmp.ne.s32.totalorder %s92, %s93
      %p104 = scmp.eq.s32.totalorder %s20, 0
      %p105 = por %p103, %p104
      %p106 = scmp.ne.s32.totalorder %s92, %s93
      %p107 = scmp.eq.s32.totalorder %s21, 3
      %p108 = por %p106, %p107
      %p110 = scmp.ne.s32.totalorder %s93, %s109
      %p111 = scmp.eq.s32.totalorder %s21, 0
      %p112 = por %p110, %p111
      %s113 = ssub.s32 %s23, %s30
      %p114 = scmp.eq.s32.totalorder %s113, 0
      %s116 = sadd.s32 %s115, 1
      %s117 = scalar_select %p114, %s115, %s116
      %p120 = pneg %p114
      %p121 = scmp.eq.s32.totalorder %s15, 3
      %p122 = por %p120, %p121
      %p123 = scmp.ne.s32.totalorder %s115, %s118
      %p124 = scmp.eq.s32.totalorder %s15, 0
      %p125 = por %p123, %p124
      %p126 = scmp.ne.s32.totalorder %s115, %s118
      %p127 = scmp.eq.s32.totalorder %s20, 3
      %p128 = por %p126, %p127
      %p129 = scmp.ne.s32.totalorder %s118, %s119
      %p130 = scmp.eq.s32.totalorder %s20, 0
      %p131 = por %p129, %p130
      %p132 = scmp.ne.s32.totalorder %s118, %s119
      %p133 = scmp.eq.s32.totalorder %s21, 3
      %p134 = por %p132, %p133
      %p136 = scmp.ne.s32.totalorder %s119, %s135
      %p137 = scmp.eq.s32.totalorder %s21, 0
      %p138 = por %p136, %p137
      %s139 = ssub.s32 %s23, %s30
      %p140 = scmp.eq.s32.totalorder %s139, 0
      %s142 = sadd.s32 %s141, 1
      %s143 = scalar_select %p140, %s141, %s142
      %p146 = pneg %p140
      %p147 = scmp.eq.s32.totalorder %s15, 3
      %p148 = por %p146, %p147
      %p149 = scmp.ne.s32.totalorder %s141, %s144
      %p150 = scmp.eq.s32.totalorder %s15, 0
      %p151 = por %p149, %p150
      %p152 = scmp.ne.s32.totalorder %s141, %s144
      %p153 = scmp.eq.s32.totalorder %s20, 3
      %p154 = por %p152, %p153
      %p155 = scmp.ne.s32.totalorder %s144, %s145
      %p156 = scmp.eq.s32.totalorder %s20, 0
      %p157 = por %p155, %p156
      %p158 = scmp.ne.s32.totalorder %s144, %s145
      %p159 = scmp.eq.s32.totalorder %s21, 3
      %p160 = por %p158, %p159
      %p162 = scmp.ne.s32.totalorder %s145, %s161
      %p163 = scmp.eq.s32.totalorder %s21, 0
      %p164 = por %p162, %p163
      %s165 = ssub.s32 %s23, %s30
      %p166 = scmp.eq.s32.totalorder %s165, 0
      %s168 = sadd.s32 %s167, 1
      %s169 = scalar_select %p166, %s167, %s168
      %p172 = pneg %p166
      %p173 = scmp.eq.s32.totalorder %s15, 3
      %p174 = por %p172, %p173
      %p175 = scmp.ne.s32.totalorder %s167, %s170
      %p176 = scmp.eq.s32.totalorder %s15, 0
      %p177 = por %p175, %p176
      %p178 = scmp.ne.s32.totalorder %s167, %s170
      %p179 = scmp.eq.s32.totalorder %s20, 3
      %p180 = por %p178, %p179
      %p181 = scmp.ne.s32.totalorder %s170, %s171
      %p182 = scmp.eq.s32.totalorder %s20, 0
      %p183 = por %p181, %p182
      %p184 = scmp.ne.s32.totalorder %s170, %s171
      %p185 = scmp.eq.s32.totalorder %s21, 3
      %p186 = por %p184, %p185
      %p188 = scmp.ne.s32.totalorder %s171, %s187
      %p189 = scmp.eq.s32.totalorder %s21, 0
      %p190 = por %p188, %p189
      %s191 = ssub.s32 %s22, %s34
      %p192 = scmp.eq.s32.totalorder %s191, 0
      %s194 = sadd.s32 %s193, 1
      %s195 = scalar_select %p192, %s193, %s194
      %p198 = pneg %p192
      %p199 = scmp.eq.s32.totalorder %s15, 3
      %p200 = por %p198, %p199
      %p201 = scmp.ne.s32.totalorder %s193, %s196
      %p202 = scmp.eq.s32.totalorder %s15, 0
      %p203 = por %p201, %p202
      %p204 = scmp.ne.s32.totalorder %s193, %s196
      %p205 = scmp.eq.s32.totalorder %s20, 3
      %p206 = por %p204, %p205
      %p207 = scmp.ne.s32.totalorder %s196, %s197
      %p208 = scmp.eq.s32.totalorder %s20, 0
      %p209 = por %p207, %p208
      %p210 = scmp.ne.s32.totalorder %s196, %s197
      %p211 = scmp.eq.s32.totalorder %s21, 3
      %p212 = por %p210, %p211
      %p214 = scmp.ne.s32.totalorder %s197, %s213
      %p215 = scmp.eq.s32.totalorder %s21, 0
      %p216 = por %p214, %p215
      %p217 = scmp.le.s32.totalorder 1, %s15
      %p218 = scmp.lt.s32.totalorder %s15, 5
      %p219 = pnand %p217, %p218
      %p220 = pneg %p219
      // Predicated region
      $region9: #{tpu_custom_call.1} parent=5 // pred_check
        _
      $region10: #{tpu_custom_call.1} parent=5 // pred_check_branch
        %222 = sbr.rel (%p219) target = $region12
      $region11: #{tpu_custom_call.1} parent=5 // pred_region
        %s223 = ssub.s32 %s15, 1
      $region12: #{tpu_custom_call.1} parent=5 // pred_fallthru
        _
      %p224 = scmp.lt.s32.totalorder %s15, 4
      // Predicated region
      $region13: #{tpu_custom_call.1} parent=5 // pred_check
        %p225 = pneg %p224
      $region14: #{tpu_custom_call.1} parent=5 // pred_check_branch
        %227 = sbr.rel (%p225) target = $region16
      $region15: #{tpu_custom_call.1} parent=5 // pred_region
        // Predicated region
        $region17: #{tpu_custom_call.1} parent=15 // pred_check
          %p228 = pneg %p47
        $region18: #{tpu_custom_call.1} parent=15 // pred_check_branch
          %230 = sbr.rel (%p228) target = $region20
        $region19: #{tpu_custom_call.1} parent=15 // pred_region
          %s231 = smul.u32 2, %s22
          %p232 = scmp.lt.s32.totalorder %s231, 3
          %s233 = scalar_select %p232, %s231, 3
          %s234 = smul.addr %s233, 8
          %s235 = scalar_lea.vmem %s0, %s234
          %s236 = smul.u32 2, %s22
        $region20: #{tpu_custom_call.1} parent=15 // pred_fallthru
          _
        // Predicated region
        $region21: #{tpu_custom_call.1} parent=15 // pred_check
          %p237 = pneg %p73
        $region22: #{tpu_custom_call.1} parent=15 // pred_check_branch
          %239 = sbr.rel (%p237) target = $region24
        $region23: #{tpu_custom_call.1} parent=15 // pred_region
          %p240 = scmp.lt.s32.totalorder %s23, 1
          %s241 = scalar_select %p240, %s23, 1
          %s242 = smul.addr %s241, 4
          %s243 = smul.addr %s242, 4
          %s244 = scalar_lea.vmem %s1, %s243
        $region24: #{tpu_custom_call.1} parent=15 // pred_fallthru
          _
        // Predicated region
        $region25: #{tpu_custom_call.1} parent=15 // pred_check
          %p245 = pneg %p99
        $region26: #{tpu_custom_call.1} parent=15 // pred_check_branch
          %247 = sbr.rel (%p245) target = $region28
        $region27: #{tpu_custom_call.1} parent=15 // pred_region
          %p248 = scmp.lt.s32.totalorder %s23, 1
          %s249 = scalar_select %p248, %s23, 1
          %s250 = smul.addr %s249, 4
          %s251 = smul.addr %s250, 4
          %s252 = scalar_lea.vmem %s2, %s251
        $region28: #{tpu_custom_call.1} parent=15 // pred_fallthru
          _
        // Predicated region
        $region29: #{tpu_custom_call.1} parent=15 // pred_check
          %p253 = pneg %p125
        $region30: #{tpu_custom_call.1} parent=15 // pred_check_branch
          %255 = sbr.rel (%p253) target = $region32
        $region31: #{tpu_custom_call.1} parent=15 // pred_region
          %p256 = scmp.lt.s32.totalorder %s23, 1
          %s257 = scalar_select %p256, %s23, 1
          %s258 = smul.addr %s257, 4
          %s259 = smul.addr %s258, 4
          %s260 = scalar_lea.vmem %s3, %s259
        $region32: #{tpu_custom_call.1} parent=15 // pred_fallthru
          _
        // Predicated region
        $region33: #{tpu_custom_call.1} parent=15 // pred_check
          %p261 = pneg %p151
        $region34: #{tpu_custom_call.1} parent=15 // pred_check_branch
          %263 = sbr.rel (%p261) target = $region36
        $region35: #{tpu_custom_call.1} parent=15 // pred_region
          %p264 = scmp.lt.s32.totalorder %s23, 1
          %s265 = scalar_select %p264, %s23, 1
          %s266 = smul.addr %s265, 16
          %s267 = smul.addr %s266, 4
          %s268 = scalar_lea.vmem %s4, %s267
        $region36: #{tpu_custom_call.1} parent=15 // pred_fallthru
          _
        // Predicated region
        $region37: #{tpu_custom_call.1} parent=15 // pred_check
          %p269 = pneg %p177
        $region38: #{tpu_custom_call.1} parent=15 // pred_check_branch
          %271 = sbr.rel (%p269) target = $region40
        $region39: #{tpu_custom_call.1} parent=15 // pred_region
          %p272 = scmp.lt.s32.totalorder %s23, 1
          %s273 = scalar_select %p272, %s23, 1
          %s274 = smul.addr %s273, 8
          %s275 = scalar_lea.vmem %s5, %s274
        $region40: #{tpu_custom_call.1} parent=15 // pred_fallthru
          _
      $region16: #{tpu_custom_call.1} parent=5 // pred_fallthru
        _
      %p276 = scmp.le.s32.totalorder 1, %s15
      %p277 = scmp.lt.s32.totalorder %s15, 5
      %p278 = pnand %p276, %p277
      %p279 = pneg %p278
      // Predicated region
      $region41: #{tpu_custom_call.1} parent=5 // pred_check
        _
      $region42: #{tpu_custom_call.1} parent=5 // pred_check_branch
        %281 = sbr.rel (%p278) target = $region44
      $region43: #{tpu_custom_call.1} parent=5 // pred_region
        %s282 = ssub.s32 %s15, 1
        %s283 = smul.u32 2, %s24
        %p284 = scmp.lt.s32.totalorder %s283, 3
        %s285 = scalar_select %p284, %s283, 3
        %s286 = smul.addr %s285, 8
        %s287 = scalar_lea.vmem %s0, %s286
        %p288 = pneg %p53
        %p289 = pneg %p50
        %p290 = scmp.lt.s32.totalorder %s25, 1
        %s291 = scalar_select %p290, %s25, 1
        %s292 = smul.addr %s291, 4
        %s293 = smul.addr %s292, 4
        %s294 = scalar_lea.vmem %s1, %s293
        %p295 = pneg %p79
        %p296 = pneg %p76
        %p297 = scmp.lt.s32.totalorder %s25, 1
        %s298 = scalar_select %p297, %s25, 1
        %s299 = smul.addr %s298, 4
        %s300 = smul.addr %s299, 4
        %s301 = scalar_lea.vmem %s2, %s300
        %p302 = pneg %p105
        %p303 = pneg %p102
        %p304 = scmp.lt.s32.totalorder %s25, 1
        %s305 = scalar_select %p304, %s25, 1
        %s306 = smul.addr %s305, 4
        %s307 = smul.addr %s306, 4
        %s308 = scalar_lea.vmem %s3, %s307
        %p309 = pneg %p131
        %p310 = pneg %p128
        %p311 = scmp.lt.s32.totalorder %s25, 1
        %s312 = scalar_select %p311, %s25, 1
        %s313 = smul.addr %s312, 16
        %s314 = smul.addr %s313, 4
        %s315 = scalar_lea.vmem %s4, %s314
        %p316 = pneg %p157
        %p317 = pneg %p154
        %p318 = scmp.lt.s32.totalorder %s25, 1
        %s319 = scalar_select %p318, %s25, 1
        %s320 = smul.addr %s319, 8
        %s321 = scalar_lea.vmem %s5, %s320
        %p322 = pneg %p183
        %p323 = pneg %p180
        %p324 = pneg %p209
        %p325 = pneg %p206
        %s326 = sand.u32 %s196, 1
        %s327 = scalar_lea.sflag [#allocation4], %s326
        %s328 = sand.u32 %s196, 1
        %s329 = smul.addr %s328, 16
        %s330 = scalar_lea.vmem [#allocation3], %s329
        %s331 = smul.u32 2, %s24
        %p332 = scmp.lt.s32.totalorder %s331, 3
        %s333 = scalar_select %p332, %s331, 3
        %s334 = smul.addr %s333, 8
        %s335 = scalar_lea.vmem %s0, %s334
        %s336 = smul.u32 2, %s24
        %p337 = scmp.lt.s32.totalorder %s25, 1
        %s338 = scalar_select %p337, %s25, 1
        %s339 = smul.addr %s338, 4
        %s340 = smul.addr %s339, 4
        %s341 = scalar_lea.vmem %s1, %s340
        %p342 = scmp.lt.s32.totalorder %s25, 1
        %s343 = scalar_select %p342, %s25, 1
        %s344 = smul.addr %s343, 4
        %s345 = smul.addr %s344, 4
        %s346 = scalar_lea.vmem %s2, %s345
        %p347 = scmp.lt.s32.totalorder %s25, 1
        %s348 = scalar_select %p347, %s25, 1
        %s349 = smul.addr %s348, 4
        %s350 = smul.addr %s349, 4
        %s351 = scalar_lea.vmem %s3, %s350
        %p352 = scmp.lt.s32.totalorder %s25, 1
        %s353 = scalar_select %p352, %s25, 1
        %s354 = smul.addr %s353, 16
        %s355 = smul.addr %s354, 4
        %s356 = scalar_lea.vmem %s4, %s355
        %p357 = scmp.lt.s32.totalorder %s25, 1
        %s358 = scalar_select %p357, %s25, 1
        %s359 = smul.addr %s358, 8
        %s360 = scalar_lea.vmem %s5, %s359
        %s361 = smul.u32 2, %s24
        %p363 = scmp.eq.s32.totalorder %s25, 0
        // Predicated region
        $region45: #{tpu_custom_call.1} parent=43 // pred_check
          %p364 = pneg %p363
        $region46: #{tpu_custom_call.1} parent=43 // pred_check_branch
          %366 = sbr.rel (%p364) target = $region48
        $region47: #{tpu_custom_call.1} parent=43 // pred_region
          %v367 = vld [vmem:[%s335] sm:$0xff]
          %v368 = vld [vmem:[%s335 + $0x8] sm:$0xff]
          %vm369 = vcmask 261120
          %370 = vst.msk [vmem:[#allocation2] sm:$0xff] %vm369, %v367
          %371 = vst.msk [vmem:[#allocation2 + $0x8] sm:$0xff] %vm369, %v368
        $region48: #{tpu_custom_call.1} parent=43 // pred_fallthru
          _
        %v372 = vld [vmem:[#allocation2] sm:$0xff]
        %v373 = vld [vmem:[#allocation2 + $0x8] sm:$0xff]
        %v374 = vld [vmem:[%s360] sm:$0xff]
        %vm375 = vcmask 261120
        %v376 = vsel %vm375, %v372, 0.0
        %377 = vadd.xlane.f32.xlu0 %v376
        %v378 = vpop.xlane.xlu0 %377
        %v379 = vsel %vm375, %v373, 0.0
        %380 = vadd.xlane.f32.xlu0 %v379
        %v381 = vpop.xlane.xlu0 %380
        %v382 = vrcp.pop 32.0
        %v383 = vmul.f32 %v378, %v382
        %v384 = vmul.f32 %v381, %v382
        %v385 = vmul.f32 %v372, %v372
        %v386 = vmul.f32 %v373, %v373
        %v387 = vsel %vm375, %v385, 0.0
        %388 = vadd.xlane.f32.xlu0 %v387
        %v389 = vpop.xlane.xlu0 %388
        %v390 = vsel %vm375, %v386, 0.0
        %391 = vadd.xlane.f32.xlu0 %v390
        %v392 = vpop.xlane.xlu0 %391
        %v393 = vmul.f32 %v389, %v382
        %v394 = vmul.f32 %v392, %v382
        %v395 = vmul.f32 %v383, %v383
        %v396 = vmul.f32 %v384, %v384
        %v397 = vsub.f32 %v393, %v395
        %v398 = vsub.f32 %v394, %v396
        %v399 = vsub.f32 %v372, %v383
        %v400 = vsub.f32 %v373, %v384
        %v401 = vadd.f32 %v397, 1e-05
        %v402 = vadd.f32 %v398, 1e-05
        %v403 = vrsqrt.pop %v401
        %v404 = vrsqrt.pop %v402
        %v405 = vmul.f32 %v399, %v403
        %v406 = vmul.f32 %v400, %v404
        %v407 = vlaneseq
        %v408 = vshrl.u32 %v407, 7
        %v409 = vsub.s32 2, %v408
        %v410 = vrot.slane %v374, %v409
        %v411 = vmul.f32 %v405, %v410
        %v412 = vmul.f32 %v406, %v410
        %v413 = vlaneseq
        %v414 = vshrl.u32 %v413, 7
        %v415 = vsub.s32 3, %v414
        %v416 = vrot.slane %v374, %v415
        %v417 = vadd.f32 %v411, %v416
        %v418 = vadd.f32 %v412, %v416
        %v419 = vpack.c.bf16 %v418, %v417
        %v420 = vld [vmem:[%s341] sm:$0xf]
        %v421 = vld [vmem:[%s341 + $0x4] sm:$0xf]
        %v422 = vld [vmem:[%s341 + $0x8] sm:$0xf]
        %v423 = vld [vmem:[%s341 + $0xc] sm:$0xf]
        %v424 = vlaneseq
        %v425 = vshrl.u32 %v424, 7
        %v426 = vsub.s32 0, %v425
        %v427 = vrot.slane %v374, %v426
        %v432 = vunpack.c.l.b16 %v420
        %v433 = vunpack.c.l.b16 %v421
        %v434 = vunpack.c.l.b16 %v422
        %v435 = vunpack.c.l.b16 %v423
        %v436 = vpack.c.b16 %v433, %v432
        %v437 = vpack.c.b16 %v435, %v434
        %v441 = vsel %vm375, %v419, 0
        %443 = vmatprep.subr.bf16.mxu0 0
        %444 = vmatpush1.bf16.msra.mxu0 %v436
        %445 = vmatprep.subr.bf16.mxu0 0
        %446 = vmatpush1.bf16.msra.mxu0 %v437
        %447 = vmatprep.subr.bf16.mxu0 0
        %448 = vmatpush1.bf16.msra.mxu0 0
        %449 = vmatprep.subr.bf16.mxu0 0
        %450 = vmatpush1.bf16.msra.mxu0 0
        %451 = vmatprep.subr.bf16.mxu0 0
        %452 = vmatpush1.bf16.msra.mxu0 0
        %453 = vmatprep.subr.bf16.mxu0 0
        %454 = vmatpush1.bf16.msra.mxu0 0
        %455 = vmatprep.subr.bf16.mxu0 0
        %456 = vmatpush1.bf16.msra.mxu0 0
        %457 = vmatprep.subr.bf16.mxu0 0
        %458 = vmatpush1.bf16.msra.mxu0 0
        %459 = vmatprep.subr.bf16.mxu0 0
        %460 = vmatpush1.bf16.msra.mxu0 0
        %461 = vmatprep.subr.bf16.mxu0 0
        %462 = vmatpush1.bf16.msra.mxu0 0
        %463 = vmatprep.subr.bf16.mxu0 0
        %464 = vmatpush1.bf16.msra.mxu0 0
        %465 = vmatprep.subr.bf16.mxu0 0
        %466 = vmatpush1.bf16.msra.mxu0 0
        %467 = vmatprep.subr.bf16.mxu0 0
        %468 = vmatpush1.bf16.msra.mxu0 0
        %469 = vmatprep.subr.bf16.mxu0 0
        %470 = vmatpush1.bf16.msra.mxu0 0
        %471 = vmatprep.subr.bf16.mxu0 0
        %472 = vmatpush1.bf16.msra.mxu0 0
        %473 = vmatprep.subr.bf16.mxu0 0
        %474 = vmatpush1.bf16.msra.mxu0 0
        %475 = vmatprep.mubr.bf16.mxu0 0
        %476 = vmatmul.mubr.bf16.gmra.mrb[0].mxu0 %v441
        %v477 = vpop.f32.mrb[0].mxu0
        %v478 = vadd.f32 %v427, %v477
        %v479 = vpop.f32.mrb[0].mxu0
        %v480 = vpop.f32.mrb[0].mxu0
        %v481 = vadd.f32 %v427, %v480
        %v482 = vpop.f32.mrb[0].mxu0
        %483 = vdwg.mxu0
        %486 = vrot.lane.b32.xlu0 %v478, 120
        %v487 = vpop.permute.xlu0 %486
        %488 = vrot.lane.b32.xlu0 %v481, 120
        %v489 = vpop.permute.xlu0 %488
        %492 = vrot.lane.b32.xlu0 %v478, 112
        %v493 = vpop.permute.xlu0 %492
        %494 = vrot.lane.b32.xlu0 %v481, 112
        %v495 = vpop.permute.xlu0 %494
        %498 = vrot.lane.b32.xlu0 %v478, 104
        %v499 = vpop.permute.xlu0 %498
        %500 = vrot.lane.b32.xlu0 %v481, 104
        %v501 = vpop.permute.xlu0 %500
        %v504 = vpack.c.bf16 %v478, %v478
        %v505 = vpack.c.bf16 %v481, %v481
        %v506 = vpack.c.bf16 %v487, %v487
        %v507 = vpack.c.bf16 %v489, %v489
        %v508 = vpack.c.bf16 %v493, %v493
        %v509 = vpack.c.bf16 %v495, %v495
        %v510 = vpack.c.bf16 %v499, %v499
        %v511 = vpack.c.bf16 %v501, %v501
        %513 = vrot.lane.b32.xlu0 %v504, 96
        %v514 = vpop.permute.xlu0 %513
        %vm515 = vcmask 64512
        %v517 = vsel %vm515, %v504, 0
        %v520 = vsel %vm515, %v514, 0
        %522 = vmatprep.subr.bf16.mxu0 0
        %523 = vmatpush1.bf16.xpose.msra.mxu0 %v520
        %524 = vmatprep.subr.bf16.mxu0 0
        %525 = vmatpush1.bf16.xpose.msra.mxu0 0
        %526 = vmatprep.subr.bf16.mxu0 0
        %527 = vmatpush1.bf16.xpose.msra.mxu0 0
        %528 = vmatprep.subr.bf16.mxu0 0
        %529 = vmatpush1.bf16.xpose.msra.mxu0 0
        %530 = vmatprep.subr.bf16.mxu0 0
        %531 = vmatpush1.bf16.xpose.msra.mxu0 0
        %532 = vmatprep.subr.bf16.mxu0 0
        %533 = vmatpush1.bf16.xpose.msra.mxu0 0
        %534 = vmatprep.subr.bf16.mxu0 0
        %535 = vmatpush1.bf16.xpose.msra.mxu0 0
        %536 = vmatprep.subr.bf16.mxu0 0
        %537 = vmatpush1.bf16.xpose.msra.mxu0 0
        %538 = vmatprep.subr.bf16.mxu0 0
        %539 = vmatpush1.bf16.xpose.msra.mxu0 0
        %540 = vmatprep.subr.bf16.mxu0 0
        %541 = vmatpush1.bf16.xpose.msra.mxu0 0
        %542 = vmatprep.subr.bf16.mxu0 0
        %543 = vmatpush1.bf16.xpose.msra.mxu0 0
        %544 = vmatprep.subr.bf16.mxu0 0
        %545 = vmatpush1.bf16.xpose.msra.mxu0 0
        %546 = vmatprep.subr.bf16.mxu0 0
        %547 = vmatpush1.bf16.xpose.msra.mxu0 0
        %548 = vmatprep.subr.bf16.mxu0 0
        %549 = vmatpush1.bf16.xpose.msra.mxu0 0
        %550 = vmatprep.subr.bf16.mxu0 0
        %551 = vmatpush1.bf16.xpose.msra.mxu0 0
        %552 = vmatprep.subr.bf16.mxu0 0
        %553 = vmatpush1.bf16.xpose.msra.mxu0 0
        %554 = vmatprep.mubr.bf16.mxu0 0
        %555 = vmatmul.mubr.bf16.gmra.mrb[0].mxu0 %v517
        %v556 = vpop.f32.mrb[0].mxu0
        %v557 = vadd.f32 0.0, %v556
        %v558 = vpop.f32.mrb[0].mxu0
        %v559 = vpop.f32.mrb[0].mxu0
        %v560 = vpop.f32.mrb[0].mxu0
        %561 = vdwg.mxu0
        %563 = vrot.lane.b32.xlu0 %v505, 96
        %v564 = vpop.permute.xlu0 %563
        %v566 = vsel %vm515, %v505, 0
        %v569 = vsel %vm515, %v564, 0
        %571 = vmatprep.subr.bf16.mxu0 0
        %572 = vmatpush1.bf16.xpose.msra.mxu0 %v569
        %573 = vmatprep.subr.bf16.mxu0 0
        %574 = vmatpush1.bf16.xpose.msra.mxu0 0
        %575 = vmatprep.subr.bf16.mxu0 0
        %576 = vmatpush1.bf16.xpose.msra.mxu0 0
        %577 = vmatprep.subr.bf16.mxu0 0
        %578 = vmatpush1.bf16.xpose.msra.mxu0 0
        %579 = vmatprep.subr.bf16.mxu0 0
        %580 = vmatpush1.bf16.xpose.msra.mxu0 0
        %581 = vmatprep.subr.bf16.mxu0 0
        %582 = vmatpush1.bf16.xpose.msra.mxu0 0
        %583 = vmatprep.subr.bf16.mxu0 0
        %584 = vmatpush1.bf16.xpose.msra.mxu0 0
        %585 = vmatprep.subr.bf16.mxu0 0
        %586 = vmatpush1.bf16.xpose.msra.mxu0 0
        %587 = vmatprep.subr.bf16.mxu0 0
        %588 = vmatpush1.bf16.xpose.msra.mxu0 0
        %589 = vmatprep.subr.bf16.mxu0 0
        %590 = vmatpush1.bf16.xpose.msra.mxu0 0
        %591 = vmatprep.subr.bf16.mxu0 0
        %592 = vmatpush1.bf16.xpose.msra.mxu0 0
        %593 = vmatprep.subr.bf16.mxu0 0
        %594 = vmatpush1.bf16.xpose.msra.mxu0 0
        %595 = vmatprep.subr.bf16.mxu0 0
        %596 = vmatpush1.bf16.xpose.msra.mxu0 0
        %597 = vmatprep.subr.bf16.mxu0 0
        %598 = vmatpush1.bf16.xpose.msra.mxu0 0
        %599 = vmatprep.subr.bf16.mxu0 0
        %600 = vmatpush1.bf16.xpose.msra.mxu0 0
        %601 = vmatprep.subr.bf16.mxu0 0
        %602 = vmatpush1.bf16.xpose.msra.mxu0 0
        %603 = vmatprep.mubr.bf16.mxu0 0
        %604 = vmatmul.mubr.bf16.gmra.mrb[0].mxu0 %v566
        %v605 = vpop.f32.mrb[0].mxu0
        %v606 = vadd.f32 0.0, %v605
        %v607 = vpop.f32.mrb[0].mxu0
        %v608 = vpop.f32.mrb[0].mxu0
        %v609 = vpop.f32.mrb[0].mxu0
        %610 = vdwg.mxu0
        %612 = vrot.lane.b32.xlu0 %v506, 96
        %v613 = vpop.permute.xlu0 %612
        %v615 = vsel %vm515, %v506, 0
        %v618 = vsel %vm515, %v613, 0
        %620 = vmatprep.subr.bf16.mxu0 0
        %621 = vmatpush1.bf16.xpose.msra.mxu0 %v618
        %622 = vmatprep.subr.bf16.mxu0 0
        %623 = vmatpush1.bf16.xpose.msra.mxu0 0
        %624 = vmatprep.subr.bf16.mxu0 0
        %625 = vmatpush1.bf16.xpose.msra.mxu0 0
        %626 = vmatprep.subr.bf16.mxu0 0
        %627 = vmatpush1.bf16.xpose.msra.mxu0 0
        %628 = vmatprep.subr.bf16.mxu0 0
        %629 = vmatpush1.bf16.xpose.msra.mxu0 0
        %630 = vmatprep.subr.bf16.mxu0 0
        %631 = vmatpush1.bf16.xpose.msra.mxu0 0
        %632 = vmatprep.subr.bf16.mxu0 0
        %633 = vmatpush1.bf16.xpose.msra.mxu0 0
        %634 = vmatprep.subr.bf16.mxu0 0
        %635 = vmatpush1.bf16.xpose.msra.mxu0 0
        %636 = vmatprep.subr.bf16.mxu0 0
        %637 = vmatpush1.bf16.xpose.msra.mxu0 0
        %638 = vmatprep.subr.bf16.mxu0 0
        %639 = vmatpush1.bf16.xpose.msra.mxu0 0
        %640 = vmatprep.subr.bf16.mxu0 0
        %641 = vmatpush1.bf16.xpose.msra.mxu0 0
        %642 = vmatprep.subr.bf16.mxu0 0
        %643 = vmatpush1.bf16.xpose.msra.mxu0 0
        %644 = vmatprep.subr.bf16.mxu0 0
        %645 = vmatpush1.bf16.xpose.msra.mxu0 0
        %646 = vmatprep.subr.bf16.mxu0 0
        %647 = vmatpush1.bf16.xpose.msra.mxu0 0
        %648 = vmatprep.subr.bf16.mxu0 0
        %649 = vmatpush1.bf16.xpose.msra.mxu0 0
        %650 = vmatprep.subr.bf16.mxu0 0
        %651 = vmatpush1.bf16.xpose.msra.mxu0 0
        %652 = vmatprep.mubr.bf16.mxu0 0
        %653 = vmatmul.mubr.bf16.gmra.mrb[0].mxu0 %v615
        %v654 = vpop.f32.mrb[0].mxu0
        %v655 = vadd.f32 0.0, %v654
        %v656 = vpop.f32.mrb[0].mxu0
        %v657 = vpop.f32.mrb[0].mxu0
        %v658 = vpop.f32.mrb[0].mxu0
        %659 = vdwg.mxu0
        %661 = vrot.lane.b32.xlu0 %v507, 96
        %v662 = vpop.permute.xlu0 %661
        %v664 = vsel %vm515, %v507, 0
        %v667 = vsel %vm515, %v662, 0
        %669 = vmatprep.subr.bf16.mxu0 0
        %670 = vmatpush1.bf16.xpose.msra.mxu0 %v667
        %671 = vmatprep.subr.bf16.mxu0 0
        %672 = vmatpush1.bf16.xpose.msra.mxu0 0
        %673 = vmatprep.subr.bf16.mxu0 0
        %674 = vmatpush1.bf16.xpose.msra.mxu0 0
        %675 = vmatprep.subr.bf16.mxu0 0
        %676 = vmatpush1.bf16.xpose.msra.mxu0 0
        %677 = vmatprep.subr.bf16.mxu0 0
        %678 = vmatpush1.bf16.xpose.msra.mxu0 0
        %679 = vmatprep.subr.bf16.mxu0 0
        %680 = vmatpush1.bf16.xpose.msra.mxu0 0
        %681 = vmatprep.subr.bf16.mxu0 0
        %682 = vmatpush1.bf16.xpose.msra.mxu0 0
        %683 = vmatprep.subr.bf16.mxu0 0
        %684 = vmatpush1.bf16.xpose.msra.mxu0 0
        %685 = vmatprep.subr.bf16.mxu0 0
        %686 = vmatpush1.bf16.xpose.msra.mxu0 0
        %687 = vmatprep.subr.bf16.mxu0 0
        %688 = vmatpush1.bf16.xpose.msra.mxu0 0
        %689 = vmatprep.subr.bf16.mxu0 0
        %690 = vmatpush1.bf16.xpose.msra.mxu0 0
        %691 = vmatprep.subr.bf16.mxu0 0
        %692 = vmatpush1.bf16.xpose.msra.mxu0 0
        %693 = vmatprep.subr.bf16.mxu0 0
        %694 = vmatpush1.bf16.xpose.msra.mxu0 0
        %695 = vmatprep.subr.bf16.mxu0 0
        %696 = vmatpush1.bf16.xpose.msra.mxu0 0
        %697 = vmatprep.subr.bf16.mxu0 0
        %698 = vmatpush1.bf16.xpose.msra.mxu0 0
        %699 = vmatprep.subr.bf16.mxu0 0
        %700 = vmatpush1.bf16.xpose.msra.mxu0 0
        %701 = vmatprep.mubr.bf16.mxu0 0
        %702 = vmatmul.mubr.bf16.gmra.mrb[0].mxu0 %v664
        %v703 = vpop.f32.mrb[0].mxu0
        %v704 = vadd.f32 0.0, %v703
        %v705 = vpop.f32.mrb[0].mxu0
        %v706 = vpop.f32.mrb[0].mxu0
        %v707 = vpop.f32.mrb[0].mxu0
        %708 = vdwg.mxu0
        %710 = vrot.lane.b32.xlu0 %v508, 96
        %v711 = vpop.permute.xlu0 %710
        %v713 = vsel %vm515, %v508, 0
        %v716 = vsel %vm515, %v711, 0
        %718 = vmatprep.subr.bf16.mxu0 0
        %719 = vmatpush1.bf16.xpose.msra.mxu0 %v716
        %720 = vmatprep.subr.bf16.mxu0 0
        %721 = vmatpush1.bf16.xpose.msra.mxu0 0
        %722 = vmatprep.subr.bf16.mxu0 0
        %723 = vmatpush1.bf16.xpose.msra.mxu0 0
        %724 = vmatprep.subr.bf16.mxu0 0
        %725 = vmatpush1.bf16.xpose.msra.mxu0 0
        %726 = vmatprep.subr.bf16.mxu0 0
        %727 = vmatpush1.bf16.xpose.msra.mxu0 0
        %728 = vmatprep.subr.bf16.mxu0 0
        %729 = vmatpush1.bf16.xpose.msra.mxu0 0
        %730 = vmatprep.subr.bf16.mxu0 0
        %731 = vmatpush1.bf16.xpose.msra.mxu0 0
        %732 = vmatprep.subr.bf16.mxu0 0
        %733 = vmatpush1.bf16.xpose.msra.mxu0 0
        %734 = vmatprep.subr.bf16.mxu0 0
        %735 = vmatpush1.bf16.xpose.msra.mxu0 0
        %736 = vmatprep.subr.bf16.mxu0 0
        %737 = vmatpush1.bf16.xpose.msra.mxu0 0
        %738 = vmatprep.subr.bf16.mxu0 0
        %739 = vmatpush1.bf16.xpose.msra.mxu0 0
        %740 = vmatprep.subr.bf16.mxu0 0
        %741 = vmatpush1.bf16.xpose.msra.mxu0 0
        %742 = vmatprep.subr.bf16.mxu0 0
        %743 = vmatpush1.bf16.xpose.msra.mxu0 0
        %744 = vmatprep.subr.bf16.mxu0 0
        %745 = vmatpush1.bf16.xpose.msra.mxu0 0
        %746 = vmatprep.subr.bf16.mxu0 0
        %747 = vmatpush1.bf16.xpose.msra.mxu0 0
        %748 = vmatprep.subr.bf16.mxu0 0
        %749 = vmatpush1.bf16.xpose.msra.mxu0 0
        %750 = vmatprep.mubr.bf16.mxu0 0
        %751 = vmatmul.mubr.bf16.gmra.mrb[0].mxu0 %v713
        %v752 = vpop.f32.mrb[0].mxu0
        %v753 = vadd.f32 0.0, %v752
        %v754 = vpop.f32.mrb[0].mxu0
        %v755 = vpop.f32.mrb[0].mxu0
        %v756 = vpop.f32.mrb[0].mxu0
        %757 = vdwg.mxu0
        %759 = vrot.lane.b32.xlu0 %v509, 96
        %v760 = vpop.permute.xlu0 %759
        %v762 = vsel %vm515, %v509, 0
        %v765 = vsel %vm515, %v760, 0
        %767 = vmatprep.subr.bf16.mxu0 0
        %768 = vmatpush1.bf16.xpose.msra.mxu0 %v765
        %769 = vmatprep.subr.bf16.mxu0 0
        %770 = vmatpush1.bf16.xpose.msra.mxu0 0
        %771 = vmatprep.subr.bf16.mxu0 0
        %772 = vmatpush1.bf16.xpose.msra.mxu0 0
        %773 = vmatprep.subr.bf16.mxu0 0
        %774 = vmatpush1.bf16.xpose.msra.mxu0 0
        %775 = vmatprep.subr.bf16.mxu0 0
        %776 = vmatpush1.bf16.xpose.msra.mxu0 0
        %777 = vmatprep.subr.bf16.mxu0 0
        %778 = vmatpush1.bf16.xpose.msra.mxu0 0
        %779 = vmatprep.subr.bf16.mxu0 0
        %780 = vmatpush1.bf16.xpose.msra.mxu0 0
        %781 = vmatprep.subr.bf16.mxu0 0
        %782 = vmatpush1.bf16.xpose.msra.mxu0 0
        %783 = vmatprep.subr.bf16.mxu0 0
        %784 = vmatpush1.bf16.xpose.msra.mxu0 0
        %785 = vmatprep.subr.bf16.mxu0 0
        %786 = vmatpush1.bf16.xpose.msra.mxu0 0
        %787 = vmatprep.subr.bf16.mxu0 0
        %788 = vmatpush1.bf16.xpose.msra.mxu0 0
        %789 = vmatprep.subr.bf16.mxu0 0
        %790 = vmatpush1.bf16.xpose.msra.mxu0 0
        %791 = vmatprep.subr.bf16.mxu0 0
        %792 = vmatpush1.bf16.xpose.msra.mxu0 0
        %793 = vmatprep.subr.bf16.mxu0 0
        %794 = vmatpush1.bf16.xpose.msra.mxu0 0
        %795 = vmatprep.subr.bf16.mxu0 0
        %796 = vmatpush1.bf16.xpose.msra.mxu0 0
        %797 = vmatprep.subr.bf16.mxu0 0
        %798 = vmatpush1.bf16.xpose.msra.mxu0 0
        %799 = vmatprep.mubr.bf16.mxu0 0
        %800 = vmatmul.mubr.bf16.gmra.mrb[0].mxu0 %v762
        %v801 = vpop.f32.mrb[0].mxu0
        %v802 = vadd.f32 0.0, %v801
        %v803 = vpop.f32.mrb[0].mxu0
        %v804 = vpop.f32.mrb[0].mxu0
        %v805 = vpop.f32.mrb[0].mxu0
        %806 = vdwg.mxu0
        %808 = vrot.lane.b32.xlu0 %v510, 96
        %v809 = vpop.permute.xlu0 %808
        %v811 = vsel %vm515, %v510, 0
        %v814 = vsel %vm515, %v809, 0
        %816 = vmatprep.subr.bf16.mxu0 0
        %817 = vmatpush1.bf16.xpose.msra.mxu0 %v814
        %818 = vmatprep.subr.bf16.mxu0 0
        %819 = vmatpush1.bf16.xpose.msra.mxu0 0
        %820 = vmatprep.subr.bf16.mxu0 0
        %821 = vmatpush1.bf16.xpose.msra.mxu0 0
        %822 = vmatprep.subr.bf16.mxu0 0
        %823 = vmatpush1.bf16.xpose.msra.mxu0 0
        %824 = vmatprep.subr.bf16.mxu0 0
        %825 = vmatpush1.bf16.xpose.msra.mxu0 0
        %826 = vmatprep.subr.bf16.mxu0 0
        %827 = vmatpush1.bf16.xpose.msra.mxu0 0
        %828 = vmatprep.subr.bf16.mxu0 0
        %829 = vmatpush1.bf16.xpose.msra.mxu0 0
        %830 = vmatprep.subr.bf16.mxu0 0
        %831 = vmatpush1.bf16.xpose.msra.mxu0 0
        %832 = vmatprep.subr.bf16.mxu0 0
        %833 = vmatpush1.bf16.xpose.msra.mxu0 0
        %834 = vmatprep.subr.bf16.mxu0 0
        %835 = vmatpush1.bf16.xpose.msra.mxu0 0
        %836 = vmatprep.subr.bf16.mxu0 0
        %837 = vmatpush1.bf16.xpose.msra.mxu0 0
        %838 = vmatprep.subr.bf16.mxu0 0
        %839 = vmatpush1.bf16.xpose.msra.mxu0 0
        %840 = vmatprep.subr.bf16.mxu0 0
        %841 = vmatpush1.bf16.xpose.msra.mxu0 0
        %842 = vmatprep.subr.bf16.mxu0 0
        %843 = vmatpush1.bf16.xpose.msra.mxu0 0
        %844 = vmatprep.subr.bf16.mxu0 0
        %845 = vmatpush1.bf16.xpose.msra.mxu0 0
        %846 = vmatprep.subr.bf16.mxu0 0
        %847 = vmatpush1.bf16.xpose.msra.mxu0 0
        %848 = vmatprep.mubr.bf16.mxu0 0
        %849 = vmatmul.mubr.bf16.gmra.mrb[0].mxu0 %v811
        %v850 = vpop.f32.mrb[0].mxu0
        %v851 = vadd.f32 0.0, %v850
        %v852 = vpop.f32.mrb[0].mxu0
        %v853 = vpop.f32.mrb[0].mxu0
        %v854 = vpop.f32.mrb[0].mxu0
        %855 = vdwg.mxu0
        %857 = vrot.lane.b32.xlu0 %v511, 96
        %v858 = vpop.permute.xlu0 %857
        %v860 = vsel %vm515, %v511, 0
        %v863 = vsel %vm515, %v858, 0
        %865 = vmatprep.subr.bf16.mxu0 0
        %866 = vmatpush1.bf16.xpose.msra.mxu0 %v863
        %867 = vmatprep.subr.bf16.mxu0 0
        %868 = vmatpush1.bf16.xpose.msra.mxu0 0
        %869 = vmatprep.subr.bf16.mxu0 0
        %870 = vmatpush1.bf16.xpose.msra.mxu0 0
        %871 = vmatprep.subr.bf16.mxu0 0
        %872 = vmatpush1.bf16.xpose.msra.mxu0 0
        %873 = vmatprep.subr.bf16.mxu0 0
        %874 = vmatpush1.bf16.xpose.msra.mxu0 0
        %875 = vmatprep.subr.bf16.mxu0 0
        %876 = vmatpush1.bf16.xpose.msra.mxu0 0
        %877 = vmatprep.subr.bf16.mxu0 0
        %878 = vmatpush1.bf16.xpose.msra.mxu0 0
        %879 = vmatprep.subr.bf16.mxu0 0
        %880 = vmatpush1.bf16.xpose.msra.mxu0 0
        %881 = vmatprep.subr.bf16.mxu0 0
        %882 = vmatpush1.bf16.xpose.msra.mxu0 0
        %883 = vmatprep.subr.bf16.mxu0 0
        %884 = vmatpush1.bf16.xpose.msra.mxu0 0
        %885 = vmatprep.subr.bf16.mxu0 0
        %886 = vmatpush1.bf16.xpose.msra.mxu0 0
        %887 = vmatprep.subr.bf16.mxu0 0
        %888 = vmatpush1.bf16.xpose.msra.mxu0 0
        %889 = vmatprep.subr.bf16.mxu0 0
        %890 = vmatpush1.bf16.xpose.msra.mxu0 0
        %891 = vmatprep.subr.bf16.mxu0 0
        %892 = vmatpush1.bf16.xpose.msra.mxu0 0
        %893 = vmatprep.subr.bf16.mxu0 0
        %894 = vmatpush1.bf16.xpose.msra.mxu0 0
        %895 = vmatprep.subr.bf16.mxu0 0
        %896 = vmatpush1.bf16.xpose.msra.mxu0 0
        %897 = vmatprep.mubr.bf16.mxu0 0
        %898 = vmatmul.mubr.bf16.gmra.mrb[0].mxu0 %v860
        %v899 = vpop.f32.mrb[0].mxu0
        %v900 = vadd.f32 0.0, %v899
        %v901 = vpop.f32.mrb[0].mxu0
        %v902 = vpop.f32.mrb[0].mxu0
        %v903 = vpop.f32.mrb[0].mxu0
        %904 = vdwg.mxu0
        %v905 = vsel %vm515, %v557, -inf
        %906 = vmax.xlane.f32.xlu0 %v905
        %v907 = vpop.xlane.xlu0 %906
        %v908 = vsel %vm515, %v606, -inf
        %909 = vmax.xlane.f32.xlu0 %v908
        %v910 = vpop.xlane.xlu0 %909
        %v911 = vsel %vm515, %v655, -inf
        %912 = vmax.xlane.f32.xlu0 %v911
        %v913 = vpop.xlane.xlu0 %912
        %v914 = vsel %vm515, %v704, -inf
        %915 = vmax.xlane.f32.xlu0 %v914
        %v916 = vpop.xlane.xlu0 %915
        %v917 = vsel %vm515, %v753, -inf
        %918 = vmax.xlane.f32.xlu0 %v917
        %v919 = vpop.xlane.xlu0 %918
        %v920 = vsel %vm515, %v802, -inf
        %921 = vmax.xlane.f32.xlu0 %v920
        %v922 = vpop.xlane.xlu0 %921
        %v923 = vsel %vm515, %v851, -inf
        %924 = vmax.xlane.f32.xlu0 %v923
        %v925 = vpop.xlane.xlu0 %924
        %v926 = vsel %vm515, %v900, -inf
        %927 = vmax.xlane.f32.xlu0 %v926
        %v928 = vpop.xlane.xlu0 %927
        %v929 = vsub.f32 %v557, %v907
        %v930 = vsub.f32 %v606, %v910
        %v931 = vsub.f32 %v655, %v913
        %v932 = vsub.f32 %v704, %v916
        %v933 = vsub.f32 %v753, %v919
        %v934 = vsub.f32 %v802, %v922
        %v935 = vsub.f32 %v851, %v925
        %v936 = vsub.f32 %v900, %v928
        %v937 = vmul.f32 %v929, 1.442695
        %v938 = vpow.pop %v937
        %v939 = vmul.f32 %v930, 1.442695
        %v940 = vpow.pop %v939
        %v941 = vmul.f32 %v931, 1.442695
        %v942 = vpow.pop %v941
        %v943 = vmul.f32 %v932, 1.442695
        %v944 = vpow.pop %v943
        %v945 = vmul.f32 %v933, 1.442695
        %v946 = vpow.pop %v945
        %v947 = vmul.f32 %v934, 1.442695
        %v948 = vpow.pop %v947
        %v949 = vmul.f32 %v935, 1.442695
        %v950 = vpow.pop %v949
        %v951 = vmul.f32 %v936, 1.442695
        %v952 = vpow.pop %v951
        %v953 = vsel %vm515, %v938, 0.0
        %954 = vadd.xlane.f32.xlu0 %v953
        %v955 = vpop.xlane.xlu0 %954
        %v956 = vsel %vm515, %v940, 0.0
        %957 = vadd.xlane.f32.xlu0 %v956
        %v958 = vpop.xlane.xlu0 %957
        %v959 = vsel %vm515, %v942, 0.0
        %960 = vadd.xlane.f32.xlu0 %v959
        %v961 = vpop.xlane.xlu0 %960
        %v962 = vsel %vm515, %v944, 0.0
        %963 = vadd.xlane.f32.xlu0 %v962
        %v964 = vpop.xlane.xlu0 %963
        %v965 = vsel %vm515, %v946, 0.0
        %966 = vadd.xlane.f32.xlu0 %v965
        %v967 = vpop.xlane.xlu0 %966
        %v968 = vsel %vm515, %v948, 0.0
        %969 = vadd.xlane.f32.xlu0 %v968
        %v970 = vpop.xlane.xlu0 %969
        %v971 = vsel %vm515, %v950, 0.0
        %972 = vadd.xlane.f32.xlu0 %v971
        %v973 = vpop.xlane.xlu0 %972
        %v974 = vsel %vm515, %v952, 0.0
        %975 = vadd.xlane.f32.xlu0 %v974
        %v976 = vpop.xlane.xlu0 %975
        %v977 = vrcp.pop %v955
        %v978 = vrcp.pop %v958
        %v979 = vrcp.pop %v961
        %v980 = vrcp.pop %v964
        %v981 = vrcp.pop %v967
        %v982 = vrcp.pop %v970
        %v983 = vrcp.pop %v973
        %v984 = vrcp.pop %v976
        %v985 = vmul.f32 %v938, %v977
        %v986 = vmul.f32 %v940, %v978
        %v987 = vmul.f32 %v942, %v979
        %v988 = vmul.f32 %v944, %v980
        %v989 = vmul.f32 %v946, %v981
        %v990 = vmul.f32 %v948, %v982
        %v991 = vmul.f32 %v950, %v983
        %v992 = vmul.f32 %v952, %v984
        %v993 = vpack.c.bf16 %v985, %v985
        %v994 = vpack.c.bf16 %v986, %v986
        %v995 = vpack.c.bf16 %v987, %v987
        %v996 = vpack.c.bf16 %v988, %v988
        %v997 = vpack.c.bf16 %v989, %v989
        %v998 = vpack.c.bf16 %v990, %v990
        %v999 = vpack.c.bf16 %v991, %v991
        %v1000 = vpack.c.bf16 %v992, %v992
        %1001 = vrot.lane.b32.xlu0 %v504, 64
        %v1002 = vpop.permute.xlu0 %1001
        %v1004 = vsel %vm515, %v993, 0
        %vm1006 = vcmask 1043456
        %v1008 = vsel %vm1006, %v1002, 0
        %1010 = vmatprep.subr.bf16.mxu0 0
        %1011 = vmatpush1.bf16.msra.mxu0 %v1008
        %1012 = vmatprep.subr.bf16.mxu0 0
        %1013 = vmatpush1.bf16.msra.mxu0 0
        %1014 = vmatprep.subr.bf16.mxu0 0
        %1015 = vmatpush1.bf16.msra.mxu0 0
        %1016 = vmatprep.subr.bf16.mxu0 0
        %1017 = vmatpush1.bf16.msra.mxu0 0
        %1018 = vmatprep.subr.bf16.mxu0 0
        %1019 = vmatpush1.bf16.msra.mxu0 0
        %1020 = vmatprep.subr.bf16.mxu0 0
        %1021 = vmatpush1.bf16.msra.mxu0 0
        %1022 = vmatprep.subr.bf16.mxu0 0
        %1023 = vmatpush1.bf16.msra.mxu0 0
        %1024 = vmatprep.subr.bf16.mxu0 0
        %1025 = vmatpush1.bf16.msra.mxu0 0
        %1026 = vmatprep.subr.bf16.mxu0 0
        %1027 = vmatpush1.bf16.msra.mxu0 0
        %1028 = vmatprep.subr.bf16.mxu0 0
        %1029 = vmatpush1.bf16.msra.mxu0 0
        %1030 = vmatprep.subr.bf16.mxu0 0
        %1031 = vmatpush1.bf16.msra.mxu0 0
        %1032 = vmatprep.subr.bf16.mxu0 0
        %1033 = vmatpush1.bf16.msra.mxu0 0
        %1034 = vmatprep.subr.bf16.mxu0 0
        %1035 = vmatpush1.bf16.msra.mxu0 0
        %1036 = vmatprep.subr.bf16.mxu0 0
        %1037 = vmatpush1.bf16.msra.mxu0 0
        %1038 = vmatprep.subr.bf16.mxu0 0
        %1039 = vmatpush1.bf16.msra.mxu0 0
        %1040 = vmatprep.subr.bf16.mxu0 0
        %1041 = vmatpush1.bf16.msra.mxu0 0
        %1042 = vmatprep.mubr.bf16.mxu0 0
        %1043 = vmatmul.mubr.bf16.gmra.mrb[0].mxu0 %v1004
        %v1044 = vpop.f32.mrb[0].mxu0
        %v1045 = vadd.f32 0.0, %v1044
        %v1046 = vpop.f32.mrb[0].mxu0
        %v1047 = vpop.f32.mrb[0].mxu0
        %v1048 = vpop.f32.mrb[0].mxu0
        %1049 = vdwg.mxu0
        %1050 = vrot.lane.b32.xlu0 %v505, 64
        %v1051 = vpop.permute.xlu0 %1050
        %v1053 = vsel %vm515, %v994, 0
        %v1056 = vsel %vm1006, %v1051, 0
        %1058 = vmatprep.subr.bf16.mxu0 0
        %1059 = vmatpush1.bf16.msra.mxu0 %v1056
        %1060 = vmatprep.subr.bf16.mxu0 0
        %1061 = vmatpush1.bf16.msra.mxu0 0
        %1062 = vmatprep.subr.bf16.mxu0 0
        %1063 = vmatpush1.bf16.msra.mxu0 0
        %1064 = vmatprep.subr.bf16.mxu0 0
        %1065 = vmatpush1.bf16.msra.mxu0 0
        %1066 = vmatprep.subr.bf16.mxu0 0
        %1067 = vmatpush1.bf16.msra.mxu0 0
        %1068 = vmatprep.subr.bf16.mxu0 0
        %1069 = vmatpush1.bf16.msra.mxu0 0
        %1070 = vmatprep.subr.bf16.mxu0 0
        %1071 = vmatpush1.bf16.msra.mxu0 0
        %1072 = vmatprep.subr.bf16.mxu0 0
        %1073 = vmatpush1.bf16.msra.mxu0 0
        %1074 = vmatprep.subr.bf16.mxu0 0
        %1075 = vmatpush1.bf16.msra.mxu0 0
        %1076 = vmatprep.subr.bf16.mxu0 0
        %1077 = vmatpush1.bf16.msra.mxu0 0
        %1078 = vmatprep.subr.bf16.mxu0 0
        %1079 = vmatpush1.bf16.msra.mxu0 0
        %1080 = vmatprep.subr.bf16.mxu0 0
        %1081 = vmatpush1.bf16.msra.mxu0 0
        %1082 = vmatprep.subr.bf16.mxu0 0
        %1083 = vmatpush1.bf16.msra.mxu0 0
        %1084 = vmatprep.subr.bf16.mxu0 0
        %1085 = vmatpush1.bf16.msra.mxu0 0
        %1086 = vmatprep.subr.bf16.mxu0 0
        %1087 = vmatpush1.bf16.msra.mxu0 0
        %1088 = vmatprep.subr.bf16.mxu0 0
        %1089 = vmatpush1.bf16.msra.mxu0 0
        %1090 = vmatprep.mubr.bf16.mxu0 0
        %1091 = vmatmul.mubr.bf16.gmra.mrb[0].mxu0 %v1053
        %v1092 = vpop.f32.mrb[0].mxu0
        %v1093 = vadd.f32 0.0, %v1092
        %v1094 = vpop.f32.mrb[0].mxu0
        %v1095 = vpop.f32.mrb[0].mxu0
        %v1096 = vpop.f32.mrb[0].mxu0
        %1097 = vdwg.mxu0
        %1098 = vrot.lane.b32.xlu0 %v506, 64
        %v1099 = vpop.permute.xlu0 %1098
        %v1101 = vsel %vm515, %v995, 0
        %v1104 = vsel %vm1006, %v1099, 0
        %1106 = vmatprep.subr.bf16.mxu0 0
        %1107 = vmatpush1.bf16.msra.mxu0 %v1104
        %1108 = vmatprep.subr.bf16.mxu0 0
        %1109 = vmatpush1.bf16.msra.mxu0 0
        %1110 = vmatprep.subr.bf16.mxu0 0
        %1111 = vmatpush1.bf16.msra.mxu0 0
        %1112 = vmatprep.subr.bf16.mxu0 0
        %1113 = vmatpush1.bf16.msra.mxu0 0
        %1114 = vmatprep.subr.bf16.mxu0 0
        %1115 = vmatpush1.bf16.msra.mxu0 0
        %1116 = vmatprep.subr.bf16.mxu0 0
        %1117 = vmatpush1.bf16.msra.mxu0 0
        %1118 = vmatprep.subr.bf16.mxu0 0
        %1119 = vmatpush1.bf16.msra.mxu0 0
        %1120 = vmatprep.subr.bf16.mxu0 0
        %1121 = vmatpush1.bf16.msra.mxu0 0
        %1122 = vmatprep.subr.bf16.mxu0 0
        %1123 = vmatpush1.bf16.msra.mxu0 0
        %1124 = vmatprep.subr.bf16.mxu0 0
        %1125 = vmatpush1.bf16.msra.mxu0 0
        %1126 = vmatprep.subr.bf16.mxu0 0
        %1127 = vmatpush1.bf16.msra.mxu0 0
        %1128 = vmatprep.subr.bf16.mxu0 0
        %1129 = vmatpush1.bf16.msra.mxu0 0
        %1130 = vmatprep.subr.bf16.mxu0 0
        %1131 = vmatpush1.bf16.msra.mxu0 0
        %1132 = vmatprep.subr.bf16.mxu0 0
        %1133 = vmatpush1.bf16.msra.mxu0 0
        %1134 = vmatprep.subr.bf16.mxu0 0
        %1135 = vmatpush1.bf16.msra.mxu0 0
        %1136 = vmatprep.subr.bf16.mxu0 0
        %1137 = vmatpush1.bf16.msra.mxu0 0
        %1138 = vmatprep.mubr.bf16.mxu0 0
        %1139 = vmatmul.mubr.bf16.gmra.mrb[0].mxu0 %v1101
        %v1140 = vpop.f32.mrb[0].mxu0
        %v1141 = vadd.f32 0.0, %v1140
        %v1142 = vpop.f32.mrb[0].mxu0
        %v1143 = vpop.f32.mrb[0].mxu0
        %v1144 = vpop.f32.mrb[0].mxu0
        %1145 = vdwg.mxu0
        %1146 = vrot.lane.b32.xlu0 %v507, 64
        %v1147 = vpop.permute.xlu0 %1146
        %v1149 = vsel %vm515, %v996, 0
        %v1152 = vsel %vm1006, %v1147, 0
        %1154 = vmatprep.subr.bf16.mxu0 0
        %1155 = vmatpush1.bf16.msra.mxu0 %v1152
        %1156 = vmatprep.subr.bf16.mxu0 0
        %1157 = vmatpush1.bf16.msra.mxu0 0
        %1158 = vmatprep.subr.bf16.mxu0 0
        %1159 = vmatpush1.bf16.msra.mxu0 0
        %1160 = vmatprep.subr.bf16.mxu0 0
        %1161 = vmatpush1.bf16.msra.mxu0 0
        %1162 = vmatprep.subr.bf16.mxu0 0
        %1163 = vmatpush1.bf16.msra.mxu0 0
        %1164 = vmatprep.subr.bf16.mxu0 0
        %1165 = vmatpush1.bf16.msra.mxu0 0
        %1166 = vmatprep.subr.bf16.mxu0 0
        %1167 = vmatpush1.bf16.msra.mxu0 0
        %1168 = vmatprep.subr.bf16.mxu0 0
        %1169 = vmatpush1.bf16.msra.mxu0 0
        %1170 = vmatprep.subr.bf16.mxu0 0
        %1171 = vmatpush1.bf16.msra.mxu0 0
        %1172 = vmatprep.subr.bf16.mxu0 0
        %1173 = vmatpush1.bf16.msra.mxu0 0
        %1174 = vmatprep.subr.bf16.mxu0 0
        %1175 = vmatpush1.bf16.msra.mxu0 0
        %1176 = vmatprep.subr.bf16.mxu0 0
        %1177 = vmatpush1.bf16.msra.mxu0 0
        %1178 = vmatprep.subr.bf16.mxu0 0
        %1179 = vmatpush1.bf16.msra.mxu0 0
        %1180 = vmatprep.subr.bf16.mxu0 0
        %1181 = vmatpush1.bf16.msra.mxu0 0
        %1182 = vmatprep.subr.bf16.mxu0 0
        %1183 = vmatpush1.bf16.msra.mxu0 0
        %1184 = vmatprep.subr.bf16.mxu0 0
        %1185 = vmatpush1.bf16.msra.mxu0 0
        %1186 = vmatprep.mubr.bf16.mxu0 0
        %1187 = vmatmul.mubr.bf16.gmra.mrb[0].mxu0 %v1149
        %v1188 = vpop.f32.mrb[0].mxu0
        %v1189 = vadd.f32 0.0, %v1188
        %v1190 = vpop.f32.mrb[0].mxu0
        %v1191 = vpop.f32.mrb[0].mxu0
        %v1192 = vpop.f32.mrb[0].mxu0
        %1193 = vdwg.mxu0
        %1194 = vrot.lane.b32.xlu0 %v508, 64
        %v1195 = vpop.permute.xlu0 %1194
        %v1197 = vsel %vm515, %v997, 0
        %v1200 = vsel %vm1006, %v1195, 0
        %1202 = vmatprep.subr.bf16.mxu0 0
        %1203 = vmatpush1.bf16.msra.mxu0 %v1200
        %1204 = vmatprep.subr.bf16.mxu0 0
        %1205 = vmatpush1.bf16.msra.mxu0 0
        %1206 = vmatprep.subr.bf16.mxu0 0
        %1207 = vmatpush1.bf16.msra.mxu0 0
        %1208 = vmatprep.subr.bf16.mxu0 0
        %1209 = vmatpush1.bf16.msra.mxu0 0
        %1210 = vmatprep.subr.bf16.mxu0 0
        %1211 = vmatpush1.bf16.msra.mxu0 0
        %1212 = vmatprep.subr.bf16.mxu0 0
        %1213 = vmatpush1.bf16.msra.mxu0 0
        %1214 = vmatprep.subr.bf16.mxu0 0
        %1215 = vmatpush1.bf16.msra.mxu0 0
        %1216 = vmatprep.subr.bf16.mxu0 0
        %1217 = vmatpush1.bf16.msra.mxu0 0
        %1218 = vmatprep.subr.bf16.mxu0 0
        %1219 = vmatpush1.bf16.msra.mxu0 0
        %1220 = vmatprep.subr.bf16.mxu0 0
        %1221 = vmatpush1.bf16.msra.mxu0 0
        %1222 = vmatprep.subr.bf16.mxu0 0
        %1223 = vmatpush1.bf16.msra.mxu0 0
        %1224 = vmatprep.subr.bf16.mxu0 0
        %1225 = vmatpush1.bf16.msra.mxu0 0
        %1226 = vmatprep.subr.bf16.mxu0 0
        %1227 = vmatpush1.bf16.msra.mxu0 0
        %1228 = vmatprep.subr.bf16.mxu0 0
        %1229 = vmatpush1.bf16.msra.mxu0 0
        %1230 = vmatprep.subr.bf16.mxu0 0
        %1231 = vmatpush1.bf16.msra.mxu0 0
        %1232 = vmatprep.subr.bf16.mxu0 0
        %1233 = vmatpush1.bf16.msra.mxu0 0
        %1234 = vmatprep.mubr.bf16.mxu0 0
        %1235 = vmatmul.mubr.bf16.gmra.mrb[0].mxu0 %v1197
        %v1236 = vpop.f32.mrb[0].mxu0
        %v1237 = vadd.f32 0.0, %v1236
        %v1238 = vpop.f32.mrb[0].mxu0
        %v1239 = vpop.f32.mrb[0].mxu0
        %v1240 = vpop.f32.mrb[0].mxu0
        %1241 = vdwg.mxu0
        %1242 = vrot.lane.b32.xlu0 %v509, 64
        %v1243 = vpop.permute.xlu0 %1242
        %v1245 = vsel %vm515, %v998, 0
        %v1248 = vsel %vm1006, %v1243, 0
        %1250 = vmatprep.subr.bf16.mxu0 0
        %1251 = vmatpush1.bf16.msra.mxu0 %v1248
        %1252 = vmatprep.subr.bf16.mxu0 0
        %1253 = vmatpush1.bf16.msra.mxu0 0
        %1254 = vmatprep.subr.bf16.mxu0 0
        %1255 = vmatpush1.bf16.msra.mxu0 0
        %1256 = vmatprep.subr.bf16.mxu0 0
        %1257 = vmatpush1.bf16.msra.mxu0 0
        %1258 = vmatprep.subr.bf16.mxu0 0
        %1259 = vmatpush1.bf16.msra.mxu0 0
        %1260 = vmatprep.subr.bf16.mxu0 0
        %1261 = vmatpush1.bf16.msra.mxu0 0
        %1262 = vmatprep.subr.bf16.mxu0 0
        %1263 = vmatpush1.bf16.msra.mxu0 0
        %1264 = vmatprep.subr.bf16.mxu0 0
        %1265 = vmatpush1.bf16.msra.mxu0 0
        %1266 = vmatprep.subr.bf16.mxu0 0
        %1267 = vmatpush1.bf16.msra.mxu0 0
        %1268 = vmatprep.subr.bf16.mxu0 0
        %1269 = vmatpush1.bf16.msra.mxu0 0
        %1270 = vmatprep.subr.bf16.mxu0 0
        %1271 = vmatpush1.bf16.msra.mxu0 0
        %1272 = vmatprep.subr.bf16.mxu0 0
        %1273 = vmatpush1.bf16.msra.mxu0 0
        %1274 = vmatprep.subr.bf16.mxu0 0
        %1275 = vmatpush1.bf16.msra.mxu0 0
        %1276 = vmatprep.subr.bf16.mxu0 0
        %1277 = vmatpush1.bf16.msra.mxu0 0
        %1278 = vmatprep.subr.bf16.mxu0 0
        %1279 = vmatpush1.bf16.msra.mxu0 0
        %1280 = vmatprep.subr.bf16.mxu0 0
        %1281 = vmatpush1.bf16.msra.mxu0 0
        %1282 = vmatprep.mubr.bf16.mxu0 0
        %1283 = vmatmul.mubr.bf16.gmra.mrb[0].mxu0 %v1245
        %v1284 = vpop.f32.mrb[0].mxu0
        %v1285 = vadd.f32 0.0, %v1284
        %v1286 = vpop.f32.mrb[0].mxu0
        %v1287 = vpop.f32.mrb[0].mxu0
        %v1288 = vpop.f32.mrb[0].mxu0
        %1289 = vdwg.mxu0
        %1290 = vrot.lane.b32.xlu0 %v510, 64
        %v1291 = vpop.permute.xlu0 %1290
        %v1293 = vsel %vm515, %v999, 0
        %v1296 = vsel %vm1006, %v1291, 0
        %1298 = vmatprep.subr.bf16.mxu0 0
        %1299 = vmatpush1.bf16.msra.mxu0 %v1296
        %1300 = vmatprep.subr.bf16.mxu0 0
        %1301 = vmatpush1.bf16.msra.mxu0 0
        %1302 = vmatprep.subr.bf16.mxu0 0
        %1303 = vmatpush1.bf16.msra.mxu0 0
        %1304 = vmatprep.subr.bf16.mxu0 0
        %1305 = vmatpush1.bf16.msra.mxu0 0
        %1306 = vmatprep.subr.bf16.mxu0 0
        %1307 = vmatpush1.bf16.msra.mxu0 0
        %1308 = vmatprep.subr.bf16.mxu0 0
        %1309 = vmatpush1.bf16.msra.mxu0 0
        %1310 = vmatprep.subr.bf16.mxu0 0
        %1311 = vmatpush1.bf16.msra.mxu0 0
        %1312 = vmatprep.subr.bf16.mxu0 0
        %1313 = vmatpush1.bf16.msra.mxu0 0
        %1314 = vmatprep.subr.bf16.mxu0 0
        %1315 = vmatpush1.bf16.msra.mxu0 0
        %1316 = vmatprep.subr.bf16.mxu0 0
        %1317 = vmatpush1.bf16.msra.mxu0 0
        %1318 = vmatprep.subr.bf16.mxu0 0
        %1319 = vmatpush1.bf16.msra.mxu0 0
        %1320 = vmatprep.subr.bf16.mxu0 0
        %1321 = vmatpush1.bf16.msra.mxu0 0
        %1322 = vmatprep.subr.bf16.mxu0 0
        %1323 = vmatpush1.bf16.msra.mxu0 0
        %1324 = vmatprep.subr.bf16.mxu0 0
        %1325 = vmatpush1.bf16.msra.mxu0 0
        %1326 = vmatprep.subr.bf16.mxu0 0
        %1327 = vmatpush1.bf16.msra.mxu0 0
        %1328 = vmatprep.subr.bf16.mxu0 0
        %1329 = vmatpush1.bf16.msra.mxu0 0
        %1330 = vmatprep.mubr.bf16.mxu0 0
        %1331 = vmatmul.mubr.bf16.gmra.mrb[0].mxu0 %v1293
        %v1332 = vpop.f32.mrb[0].mxu0
        %v1333 = vadd.f32 0.0, %v1332
        %v1334 = vpop.f32.mrb[0].mxu0
        %v1335 = vpop.f32.mrb[0].mxu0
        %v1336 = vpop.f32.mrb[0].mxu0
        %1337 = vdwg.mxu0
        %1338 = vrot.lane.b32.xlu0 %v511, 64
        %v1339 = vpop.permute.xlu0 %1338
        %v1341 = vsel %vm515, %v1000, 0
        %v1344 = vsel %vm1006, %v1339, 0
        %1346 = vmatprep.subr.bf16.mxu0 0
        %1347 = vmatpush1.bf16.msra.mxu0 %v1344
        %1348 = vmatprep.subr.bf16.mxu0 0
        %1349 = vmatpush1.bf16.msra.mxu0 0
        %1350 = vmatprep.subr.bf16.mxu0 0
        %1351 = vmatpush1.bf16.msra.mxu0 0
        %1352 = vmatprep.subr.bf16.mxu0 0
        %1353 = vmatpush1.bf16.msra.mxu0 0
        %1354 = vmatprep.subr.bf16.mxu0 0
        %1355 = vmatpush1.bf16.msra.mxu0 0
        %1356 = vmatprep.subr.bf16.mxu0 0
        %1357 = vmatpush1.bf16.msra.mxu0 0
        %1358 = vmatprep.subr.bf16.mxu0 0
        %1359 = vmatpush1.bf16.msra.mxu0 0
        %1360 = vmatprep.subr.bf16.mxu0 0
        %1361 = vmatpush1.bf16.msra.mxu0 0
        %1362 = vmatprep.subr.bf16.mxu0 0
        %1363 = vmatpush1.bf16.msra.mxu0 0
        %1364 = vmatprep.subr.bf16.mxu0 0
        %1365 = vmatpush1.bf16.msra.mxu0 0
        %1366 = vmatprep.subr.bf16.mxu0 0
        %1367 = vmatpush1.bf16.msra.mxu0 0
        %1368 = vmatprep.subr.bf16.mxu0 0
        %1369 = vmatpush1.bf16.msra.mxu0 0
        %1370 = vmatprep.subr.bf16.mxu0 0
        %1371 = vmatpush1.bf16.msra.mxu0 0
        %1372 = vmatprep.subr.bf16.mxu0 0
        %1373 = vmatpush1.bf16.msra.mxu0 0
        %1374 = vmatprep.subr.bf16.mxu0 0
        %1375 = vmatpush1.bf16.msra.mxu0 0
        %1376 = vmatprep.subr.bf16.mxu0 0
        %1377 = vmatpush1.bf16.msra.mxu0 0
        %1378 = vmatprep.mubr.bf16.mxu0 0
        %1379 = vmatmul.mubr.bf16.gmra.mrb[0].mxu0 %v1341
        %v1380 = vpop.f32.mrb[0].mxu0
        %v1381 = vadd.f32 0.0, %v1380
        %v1382 = vpop.f32.mrb[0].mxu0
        %v1383 = vpop.f32.mrb[0].mxu0
        %v1384 = vpop.f32.mrb[0].mxu0
        %1385 = vdwg.mxu0
        %1388 = vrot.lane.b32.xlu0 %v1141, 8
        %v1389 = vpop.permute.xlu0 %1388
        %1390 = vrot.lane.b32.xlu0 %v1189, 8
        %v1391 = vpop.permute.xlu0 %1390
        %1396 = vrot.lane.b32.xlu0 %v1237, 16
        %v1397 = vpop.permute.xlu0 %1396
        %1398 = vrot.lane.b32.xlu0 %v1285, 16
        %v1399 = vpop.permute.xlu0 %1398
        %1404 = vrot.lane.b32.xlu0 %v1333, 24
        %v1405 = vpop.permute.xlu0 %1404
        %1406 = vrot.lane.b32.xlu0 %v1381, 24
        %v1407 = vpop.permute.xlu0 %1406
        %v1410 = vsel %vm515, %v1045, %v1389
        %v1411 = vsel %vm515, %v1093, %v1391
        %vm1412 = vcmask 130048
        %v1413 = vsel %vm1412, %v1410, %v1397
        %v1414 = vsel %vm1412, %v1411, %v1399
        %vm1415 = vcmask 195584
        %v1416 = vsel %vm1415, %v1413, %v1405
        %v1417 = vsel %vm1415, %v1414, %v1407
        %v1418 = vpack.c.bf16 %v1417, %v1416
        %v1419 = vld [vmem:[%s346] sm:$0xf]
        %v1420 = vld [vmem:[%s346 + $0x4] sm:$0xf]
        %v1421 = vld [vmem:[%s346 + $0x8] sm:$0xf]
        %v1422 = vld [vmem:[%s346 + $0xc] sm:$0xf]
        %v1423 = vlaneseq
        %v1424 = vshrl.u32 %v1423, 7
        %v1425 = vsub.s32 1, %v1424
        %v1426 = vrot.slane %v374, %v1425
        %v1431 = vunpack.c.l.b16 %v1419
        %v1432 = vunpack.c.l.b16 %v1420
        %v1433 = vunpack.c.l.b16 %v1421
        %v1434 = vunpack.c.l.b16 %v1422
        %v1435 = vpack.c.b16 %v1432, %v1431
        %v1436 = vpack.c.b16 %v1434, %v1433
        %v1440 = vsel %vm375, %v1418, 0
        %1442 = vmatprep.subr.bf16.mxu0 0
        %1443 = vmatpush1.bf16.msra.mxu0 %v1435
        %1444 = vmatprep.subr.bf16.mxu0 0
        %1445 = vmatpush1.bf16.msra.mxu0 %v1436
        %1446 = vmatprep.subr.bf16.mxu0 0
        %1447 = vmatpush1.bf16.msra.mxu0 0
        %1448 = vmatprep.subr.bf16.mxu0 0
        %1449 = vmatpush1.bf16.msra.mxu0 0
        %1450 = vmatprep.subr.bf16.mxu0 0
        %1451 = vmatpush1.bf16.msra.mxu0 0
        %1452 = vmatprep.subr.bf16.mxu0 0
        %1453 = vmatpush1.bf16.msra.mxu0 0
        %1454 = vmatprep.subr.bf16.mxu0 0
        %1455 = vmatpush1.bf16.msra.mxu0 0
        %1456 = vmatprep.subr.bf16.mxu0 0
        %1457 = vmatpush1.bf16.msra.mxu0 0
        %1458 = vmatprep.subr.bf16.mxu0 0
        %1459 = vmatpush1.bf16.msra.mxu0 0
        %1460 = vmatprep.subr.bf16.mxu0 0
        %1461 = vmatpush1.bf16.msra.mxu0 0
        %1462 = vmatprep.subr.bf16.mxu0 0
        %1463 = vmatpush1.bf16.msra.mxu0 0
        %1464 = vmatprep.subr.bf16.mxu0 0
        %1465 = vmatpush1.bf16.msra.mxu0 0
        %1466 = vmatprep.subr.bf16.mxu0 0
        %1467 = vmatpush1.bf16.msra.mxu0 0
        %1468 = vmatprep.subr.bf16.mxu0 0
        %1469 = vmatpush1.bf16.msra.mxu0 0
        %1470 = vmatprep.subr.bf16.mxu0 0
        %1471 = vmatpush1.bf16.msra.mxu0 0
        %1472 = vmatprep.subr.bf16.mxu0 0
        %1473 = vmatpush1.bf16.msra.mxu0 0
        %1474 = vmatprep.mubr.bf16.mxu0 0
        %1475 = vmatmul.mubr.bf16.gmra.mrb[0].mxu0 %v1440
        %v1476 = vpop.f32.mrb[0].mxu0
        %v1477 = vadd.f32 %v1426, %v1476
        %v1478 = vpop.f32.mrb[0].mxu0
        %v1479 = vpop.f32.mrb[0].mxu0
        %v1480 = vadd.f32 %v1426, %v1479
        %v1481 = vpop.f32.mrb[0].mxu0
        %1482 = vdwg.mxu0
        %v1483 = vadd.f32 %v372, %v1477
        %v1484 = vadd.f32 %v373, %v1480
        %v1485 = vsel %vm375, %v1483, 0.0
        %1486 = vadd.xlane.f32.xlu0 %v1485
        %v1487 = vpop.xlane.xlu0 %1486
        %v1488 = vsel %vm375, %v1484, 0.0
        %1489 = vadd.xlane.f32.xlu0 %v1488
        %v1490 = vpop.xlane.xlu0 %1489
        %v1491 = vmul.f32 %v1487, %v382
        %v1492 = vmul.f32 %v1490, %v382
        %v1493 = vmul.f32 %v1483, %v1483
        %v1494 = vmul.f32 %v1484, %v1484
        %v1495 = vsel %vm375, %v1493, 0.0
        %1496 = vadd.xlane.f32.xlu0 %v1495
        %v1497 = vpop.xlane.xlu0 %1496
        %v1498 = vsel %vm375, %v1494, 0.0
        %1499 = vadd.xlane.f32.xlu0 %v1498
        %v1500 = vpop.xlane.xlu0 %1499
        %v1501 = vmul.f32 %v1497, %v382
        %v1502 = vmul.f32 %v1500, %v382
        %v1503 = vmul.f32 %v1491, %v1491
        %v1504 = vmul.f32 %v1492, %v1492
        %v1505 = vsub.f32 %v1501, %v1503
        %v1506 = vsub.f32 %v1502, %v1504
        %v1507 = vsub.f32 %v1483, %v1491
        %v1508 = vsub.f32 %v1484, %v1492
        %v1509 = vadd.f32 %v1505, 1e-05
        %v1510 = vadd.f32 %v1506, 1e-05
        %v1511 = vrsqrt.pop %v1509
        %v1512 = vrsqrt.pop %v1510
        %v1513 = vmul.f32 %v1507, %v1511
        %v1514 = vmul.f32 %v1508, %v1512
        %v1515 = vlaneseq
        %v1516 = vshrl.u32 %v1515, 7
        %v1517 = vsub.s32 6, %v1516
        %v1518 = vrot.slane %v374, %v1517
        %v1519 = vmul.f32 %v1513, %v1518
        %v1520 = vmul.f32 %v1514, %v1518
        %v1521 = vlaneseq
        %v1522 = vshrl.u32 %v1521, 7
        %v1523 = vsub.s32 7, %v1522
        %v1524 = vrot.slane %v374, %v1523
        %v1525 = vadd.f32 %v1519, %v1524
        %v1526 = vadd.f32 %v1520, %v1524
        %v1527 = vpack.c.bf16 %v1526, %v1525
        %v1528 = vld [vmem:[%s351] sm:$0xf]
        %v1529 = vld [vmem:[%s351 + $0x4] sm:$0xf]
        %v1530 = vld [vmem:[%s351 + $0x8] sm:$0xf]
        %v1531 = vld [vmem:[%s351 + $0xc] sm:$0xf]
        %v1532 = vlaneseq
        %v1533 = vshrl.u32 %v1532, 7
        %v1534 = vsub.s32 4, %v1533
        %v1535 = vrot.slane %v374, %v1534
        %v1540 = vunpack.c.l.b16 %v1528
        %v1541 = vunpack.c.l.b16 %v1529
        %v1542 = vunpack.c.l.b16 %v1530
        %v1543 = vunpack.c.l.b16 %v1531
        %v1544 = vpack.c.b16 %v1541, %v1540
        %v1545 = vpack.c.b16 %v1543, %v1542
        %v1549 = vsel %vm375, %v1527, 0
        %1551 = vmatprep.subr.bf16.mxu0 0
        %1552 = vmatpush1.bf16.msra.mxu0 %v1544
        %1553 = vmatprep.subr.bf16.mxu0 0
        %1554 = vmatpush1.bf16.msra.mxu0 %v1545
        %1555 = vmatprep.subr.bf16.mxu0 0
        %1556 = vmatpush1.bf16.msra.mxu0 0
        %1557 = vmatprep.subr.bf16.mxu0 0
        %1558 = vmatpush1.bf16.msra.mxu0 0
        %1559 = vmatprep.subr.bf16.mxu0 0
        %1560 = vmatpush1.bf16.msra.mxu0 0
        %1561 = vmatprep.subr.bf16.mxu0 0
        %1562 = vmatpush1.bf16.msra.mxu0 0
        %1563 = vmatprep.subr.bf16.mxu0 0
        %1564 = vmatpush1.bf16.msra.mxu0 0
        %1565 = vmatprep.subr.bf16.mxu0 0
        %1566 = vmatpush1.bf16.msra.mxu0 0
        %1567 = vmatprep.subr.bf16.mxu0 0
        %1568 = vmatpush1.bf16.msra.mxu0 0
        %1569 = vmatprep.subr.bf16.mxu0 0
        %1570 = vmatpush1.bf16.msra.mxu0 0
        %1571 = vmatprep.subr.bf16.mxu0 0
        %1572 = vmatpush1.bf16.msra.mxu0 0
        %1573 = vmatprep.subr.bf16.mxu0 0
        %1574 = vmatpush1.bf16.msra.mxu0 0
        %1575 = vmatprep.subr.bf16.mxu0 0
        %1576 = vmatpush1.bf16.msra.mxu0 0
        %1577 = vmatprep.subr.bf16.mxu0 0
        %1578 = vmatpush1.bf16.msra.mxu0 0
        %1579 = vmatprep.subr.bf16.mxu0 0
        %1580 = vmatpush1.bf16.msra.mxu0 0
        %1581 = vmatprep.subr.bf16.mxu0 0
        %1582 = vmatpush1.bf16.msra.mxu0 0
        %1583 = vmatprep.mubr.bf16.mxu0 0
        %1584 = vmatmul.mubr.bf16.gmra.mrb[0].mxu0 %v1549
        %v1585 = vpop.f32.mrb[0].mxu0
        %v1586 = vadd.f32 %v1535, %v1585
        %v1587 = vpop.f32.mrb[0].mxu0
        %v1588 = vpop.f32.mrb[0].mxu0
        %v1589 = vadd.f32 %v1535, %v1588
        %v1590 = vpop.f32.mrb[0].mxu0
        %1591 = vdwg.mxu0
        %v1592 = vmul.f32 %v1586, 1.702
        %v1593 = vmul.f32 %v1589, 1.702
        %v1594 = vxor.u32 %v1592, 2147483648
        %v1595 = vxor.u32 %v1593, 2147483648
        %v1596 = vmul.f32 %v1594, 1.442695
        %v1597 = vpow.pop %v1596
        %v1598 = vmul.f32 %v1595, 1.442695
        %v1599 = vpow.pop %v1598
        %v1600 = vadd.f32 %v1597, 1.0
        %v1601 = vadd.f32 %v1599, 1.0
        %v1602 = vrcp.pop %v1600
        %v1603 = vmul.f32 1.0, %v1602
        %v1604 = vrcp.pop %v1601
        %v1605 = vmul.f32 1.0, %v1604
        %v1606 = vmul.f32 %v1586, %v1603
        %v1607 = vmul.f32 %v1589, %v1605
        %v1608 = vpack.c.bf16 %v1607, %v1606
        %v1609 = vld [vmem:[%s356] sm:$0xf]
        %v1610 = vld [vmem:[%s356 + $0x4] sm:$0xf]
        %v1611 = vld [vmem:[%s356 + $0x8] sm:$0xf]
        %v1612 = vld [vmem:[%s356 + $0xc] sm:$0xf]
        %v1613 = vld [vmem:[%s356 + $0x10] sm:$0xf]
        %v1614 = vld [vmem:[%s356 + $0x14] sm:$0xf]
        %v1615 = vld [vmem:[%s356 + $0x18] sm:$0xf]
        %v1616 = vld [vmem:[%s356 + $0x1c] sm:$0xf]
        %v1617 = vld [vmem:[%s356 + $0x20] sm:$0xf]
        %v1618 = vld [vmem:[%s356 + $0x24] sm:$0xf]
        %v1619 = vld [vmem:[%s356 + $0x28] sm:$0xf]
        %v1620 = vld [vmem:[%s356 + $0x2c] sm:$0xf]
        %v1621 = vld [vmem:[%s356 + $0x30] sm:$0xf]
        %v1622 = vld [vmem:[%s356 + $0x34] sm:$0xf]
        %v1623 = vld [vmem:[%s356 + $0x38] sm:$0xf]
        %v1624 = vld [vmem:[%s356 + $0x3c] sm:$0xf]
        %v1625 = vlaneseq
        %v1626 = vshrl.u32 %v1625, 7
        %v1627 = vsub.s32 5, %v1626
        %v1628 = vrot.slane %v374, %v1627
        %v1645 = vunpack.c.l.b16 %v1609
        %v1646 = vunpack.c.l.b16 %v1610
        %v1647 = vunpack.c.l.b16 %v1611
        %v1648 = vunpack.c.l.b16 %v1612
        %v1649 = vunpack.c.l.b16 %v1613
        %v1650 = vunpack.c.l.b16 %v1614
        %v1651 = vunpack.c.l.b16 %v1615
        %v1652 = vunpack.c.l.b16 %v1616
        %v1653 = vunpack.c.l.b16 %v1617
        %v1654 = vunpack.c.l.b16 %v1618
        %v1655 = vunpack.c.l.b16 %v1619
        %v1656 = vunpack.c.l.b16 %v1620
        %v1657 = vunpack.c.l.b16 %v1621
        %v1658 = vunpack.c.l.b16 %v1622
        %v1659 = vunpack.c.l.b16 %v1623
        %v1660 = vunpack.c.l.b16 %v1624
        %v1661 = vpack.c.b16 %v1646, %v1645
        %v1662 = vpack.c.b16 %v1648, %v1647
        %v1663 = vpack.c.b16 %v1650, %v1649
        %v1664 = vpack.c.b16 %v1652, %v1651
        %v1665 = vpack.c.b16 %v1654, %v1653
        %v1666 = vpack.c.b16 %v1656, %v1655
        %v1667 = vpack.c.b16 %v1658, %v1657
        %v1668 = vpack.c.b16 %v1660, %v1659
        %1677 = vmatprep.subr.bf16.mxu0 0
        %1678 = vmatpush1.bf16.msra.mxu0 %v1661
        %1679 = vmatprep.subr.bf16.mxu0 0
        %1680 = vmatpush1.bf16.msra.mxu0 %v1662
        %1681 = vmatprep.subr.bf16.mxu0 0
        %1682 = vmatpush1.bf16.msra.mxu0 %v1663
        %1683 = vmatprep.subr.bf16.mxu0 0
        %1684 = vmatpush1.bf16.msra.mxu0 %v1664
        %1685 = vmatprep.subr.bf16.mxu0 0
        %1686 = vmatpush1.bf16.msra.mxu0 %v1665
        %1687 = vmatprep.subr.bf16.mxu0 0
        %1688 = vmatpush1.bf16.msra.mxu0 %v1666
        %1689 = vmatprep.subr.bf16.mxu0 0
        %1690 = vmatpush1.bf16.msra.mxu0 %v1667
        %1691 = vmatprep.subr.bf16.mxu0 0
        %1692 = vmatpush1.bf16.msra.mxu0 %v1668
        %1693 = vmatprep.subr.bf16.mxu0 0
        %1694 = vmatpush1.bf16.msra.mxu0 0
        %1695 = vmatprep.subr.bf16.mxu0 0
        %1696 = vmatpush1.bf16.msra.mxu0 0
        %1697 = vmatprep.subr.bf16.mxu0 0
        %1698 = vmatpush1.bf16.msra.mxu0 0
        %1699 = vmatprep.subr.bf16.mxu0 0
        %1700 = vmatpush1.bf16.msra.mxu0 0
        %1701 = vmatprep.subr.bf16.mxu0 0
        %1702 = vmatpush1.bf16.msra.mxu0 0
        %1703 = vmatprep.subr.bf16.mxu0 0
        %1704 = vmatpush1.bf16.msra.mxu0 0
        %1705 = vmatprep.subr.bf16.mxu0 0
        %1706 = vmatpush1.bf16.msra.mxu0 0
        %1707 = vmatprep.subr.bf16.mxu0 0
        %1708 = vmatpush1.bf16.msra.mxu0 0
        %1709 = vmatprep.mubr.bf16.mxu0 0
        %1710 = vmatmul.mubr.bf16.gmra.mrb[0].mxu0 %v1608
        %v1711 = vpop.f32.mrb[0].mxu0
        %v1712 = vadd.f32 %v1628, %v1711
        %v1713 = vpop.f32.mrb[0].mxu0
        %v1714 = vpop.f32.mrb[0].mxu0
        %v1715 = vadd.f32 %v1628, %v1714
        %v1716 = vpop.f32.mrb[0].mxu0
        %1717 = vdwg.mxu0
        %v1718 = vadd.f32 %v1483, %v1712
        %v1719 = vadd.f32 %v1484, %v1715
        %1720 = vst.msk [vmem:[#allocation2] sm:$0xff] %vm375, %v1718
        %1721 = vst.msk [vmem:[#allocation2 + $0x8] sm:$0xff] %vm375, %v1719
        %p1722 = scmp.eq.s32.totalorder %s25, 1
        // Predicated region
        $region49: #{tpu_custom_call.1} parent=43 // pred_check
          %p1723 = pneg %p1722
        $region50: #{tpu_custom_call.1} parent=43 // pred_check_branch
          %1725 = sbr.rel (%p1723) target = $region52
        $region51: #{tpu_custom_call.1} parent=43 // pred_region
          %1726 = vst.msk [vmem:[%s330] sm:$0xff] %vm375, %v1718
          %1727 = vst.msk [vmem:[%s330 + $0x8] sm:$0xff] %vm375, %v1719
        $region52: #{tpu_custom_call.1} parent=43 // pred_fallthru
          _
        %s1728 = sand.u32 %s196, 1
        %s1729 = scalar_lea.sflag [#allocation4], %s1728
        %s1730 = sand.u32 %s196, 1
        %s1731 = smul.addr %s1730, 16
        %s1732 = scalar_lea.vmem [#allocation3], %s1731
        // Predicated region
        $region53: #{tpu_custom_call.1} parent=43 // pred_check
          %p1733 = pneg %p206
        $region54: #{tpu_custom_call.1} parent=43 // pred_check_branch
          %1735 = sbr.rel (%p1733) target = $region56
        $region55: #{tpu_custom_call.1} parent=43 // pred_region
          %s1736 = smul.u32 2, %s24
          %s1738 = ssub.s32 256, 256
          %1739 = vsyncadd %s1729, %s1738
          %s1740 = smul.addr %s1736, 128
          %s1741 = scalar_lea.hbm %s6, %s1740
          %s1742 = sshll.u32 %s1732, 4
          %s1743 = int_to_ptr.vmem [resolvable:$true] %s1742
          %1748 = dma.vmem_to_hbm [thread:$0]  %s1743, 256, %s1741, %s1729, 128, 128, 8
        $region56: #{tpu_custom_call.1} parent=43 // pred_fallthru
          _
      $region44: #{tpu_custom_call.1} parent=5 // pred_fallthru
        _
      %p1749 = scmp.le.s32.totalorder 2, %s15
      // Predicated region
      $region57: #{tpu_custom_call.1} parent=5 // pred_check
        %p1750 = pneg %p1749
      $region58: #{tpu_custom_call.1} parent=5 // pred_check_branch
        %1752 = sbr.rel (%p1750) target = $region60
      $region59: #{tpu_custom_call.1} parent=5 // pred_region
        %s1753 = ssub.s32 %s15, 2
        // Predicated region
        $region61: #{tpu_custom_call.1} parent=59 // pred_check
          %p1754 = pneg %p212
        $region62: #{tpu_custom_call.1} parent=59 // pred_check_branch
          %1756 = sbr.rel (%p1754) target = $region64
        $region63: #{tpu_custom_call.1} parent=59 // pred_region
          %s1757 = sand.u32 %s197, 1
          %s1758 = scalar_lea.sflag [#allocation4], %s1757
          %s1759 = sand.u32 %s197, 1
          %s1760 = smul.addr %s1759, 16
          %s1761 = scalar_lea.vmem [#allocation3], %s1760
          %1762 = dma.done %s1758, 256
        $region64: #{tpu_custom_call.1} parent=59 // pred_fallthru
          _
      $region60: #{tpu_custom_call.1} parent=5 // pred_fallthru
        _
    $region6: #{tpu_custom_call.1} parent=1 // loop_footer
      %s19 = sadd.s32 1, %s15
    $region7: #{tpu_custom_call.1} parent=1 // loop_footer_branch
      %14 = sbr.rel target = $region3
    $region8: #{tpu_custom_call.1} parent=1 // loop_exit
      _
    %1763 = vsyncpa [#allocation4], 1
    %s1764 = scalar_lea.sflag [#allocation4], 1
    %1765 = vsyncpa %s1764, 1

</llo_original>
